<compile_context>
chip_gen: v5e
topology: v5e:2x2
jax: 0.10.0
libtpu: 0.0.40
codegen_flags: <defaults>
</compile_context>

<pallas_src>
import functools

import jax
import jax.numpy as jnp
from jax.experimental import pallas as pl
from jax.experimental.pallas import tpu as pltpu

HIDDEN = 768        # fixed by nn.Linear(768, n_classes)
C_PAD = 128         # lane-dense classifier output width
B_ALIGN = 8         # sublane alignment for the batch dim


def bert_cls_kernel(cls_ref, wp_ref, bp_ref, wfc_ref, bfc_ref, out_ref):
    # cls_ref : [Bp, H]      f32/bf16  CLS-token activations
    # wp_ref  : [H, H]       bf16      pooler weight ([in, out] layout)
    # bp_ref  : [1, H]       f32       pooler bias
    # wfc_ref : [H, C_PAD]   f32       classifier weight ([in, out], zero-padded)
    # bfc_ref : [1, C_PAD]   f32       classifier bias (zero-padded)
    # out_ref : [Bp, C_PAD]  f32       padded logits
    cls = cls_ref[...].astype(wp_ref.dtype)                       # -> bf16
    pre = jnp.dot(cls, wp_ref[...],
                  preferred_element_type=jnp.float32) + bp_ref[...]
    pooled = jnp.tanh(pre)                                         # f32, stays f32
    logits = jnp.dot(pooled, wfc_ref[...],
                     preferred_element_type=jnp.float32) + bfc_ref[...]
    out_ref[...] = logits


def prepare_params(wp, bp, wfc, bfc):
    """One-time (load-time) parameter prep — NOT part of the per-call hot path.

    Takes PyTorch nn.Linear [out, in] weights; returns:
      wp_t   [H, H]      bf16  (pooler weight, [in, out])
      bp_2d  [1, H]      f32
      wfc_t  [H, C_PAD]  f32   (classifier weight, [in, out], lane-padded)
      bfc_p  [1, C_PAD]  f32
    """
    H = wp.shape[0]
    C = wfc.shape[0]
    assert H == HIDDEN and C <= C_PAD
    wp_t = wp.T.astype(jnp.bfloat16)                                   # [H, H]
    bp_2d = bp.reshape(1, H).astype(jnp.float32)                       # [1, H]
    wfc_pad = jnp.pad(wfc, ((0, C_PAD - C), (0, 0)))                   # [C_PAD, H]
    wfc_t = wfc_pad.T.astype(jnp.float32)                              # [H, C_PAD]
    bfc_p = jnp.pad(bfc, (0, C_PAD - C)).reshape(1, C_PAD).astype(jnp.float32)
    return wp_t, bp_2d, wfc_t, bfc_p


@functools.partial(jax.jit, static_argnames=("n_classes",))
def bert_cls_forward(hidden_states, wp_t, bp_2d, wfc_t, bfc_p, *, n_classes):
    """hidden_states: [B, S, H] (f32 or bf16) encoder last_hidden_state.
    Params come from prepare_params.  Returns [B, n_classes] f32 logits."""
    B, S, H = hidden_states.shape
    assert H == HIDDEN

    # Slice the CLS token outside the kernel: the kernel only ever touches
    # [B, H] of activations (no S-fold HBM waste inside pallas_call).
    cls = hidden_states[:, 0, :]                                   # [B, H]

    # Pad batch to full sublanes so vreg ops / stores are unmasked.
    Bp = max(B_ALIGN, ((B + B_ALIGN - 1) // B_ALIGN) * B_ALIGN)
    if Bp != B:
        cls = jnp.pad(cls, ((0, Bp - B), (0, 0)))

    cost = pl.CostEstimate(
        flops=2 * Bp * H * H + 2 * Bp * H * C_PAD,
        transcendentals=Bp * H,
        bytes_accessed=(Bp * H * cls.dtype.itemsize   # CLS activations
                        + H * H * 2                   # pooler weight (bf16)
                        + H * 4                       # pooler bias
                        + H * C_PAD * 4               # classifier weight (f32)
                        + C_PAD * 4                   # classifier bias
                        + Bp * C_PAD * 4),            # logits out
    )

    out = pl.pallas_call(
        bert_cls_kernel,
        out_shape=jax.ShapeDtypeStruct((Bp, C_PAD), jnp.float32),
        grid=(1,),
        in_specs=[
            pl.BlockSpec((Bp, H), lambda i: (0, 0)),        # CLS activations
            pl.BlockSpec((H, H), lambda i: (0, 0)),         # pooler W [in, out]
            pl.BlockSpec((1, H), lambda i: (0, 0)),         # pooler b
            pl.BlockSpec((H, C_PAD), lambda i: (0, 0)),     # classifier W
            pl.BlockSpec((1, C_PAD), lambda i: (0, 0)),     # classifier b
        ],
        out_specs=pl.BlockSpec((Bp, C_PAD), lambda i: (0, 0)),
        compiler_params=pltpu.CompilerParams(
            dimension_semantics=("arbitrary",),
        ),
        cost_estimate=cost,
    )(cls, wp_t, bp_2d, wfc_t, bfc_p)

    return out[:B, :n_classes]


def reference_forward(hidden_states, wp, bp, wfc, bfc):
    cls_tok = hidden_states[:, 0, :]
    pooled = jnp.tanh(cls_tok @ wp.T + bp)
    return pooled @ wfc.T + bfc


if __name__ == "__main__":
    B, S, H = 2, 8, HIDDEN
    n_classes = 8

    key = jax.random.PRNGKey(0)
    k_hs, k_wp, k_bp, k_wfc, k_bfc = jax.random.split(key, 5)

    hidden_states = jax.random.normal(k_hs, (B, S, H), dtype=jnp.float32)
    # Deterministic synthetic parameters (PyTorch nn.Linear [out, in] layout).
    wp = jax.random.normal(k_wp, (H, H), dtype=jnp.float32) * 0.02
    bp = jax.random.normal(k_bp, (H,), dtype=jnp.float32) * 0.02
    wfc = jax.random.normal(k_wfc, (n_classes, H), dtype=jnp.float32) * 0.02
    bfc = jax.random.normal(k_bfc, (n_classes,), dtype=jnp.float32) * 0.02

    # One-time weight preparation (load time, outside the hot path).
    wp_t, bp_2d, wfc_t, bfc_p = prepare_params(wp, bp, wfc, bfc)

    logits = bert_cls_forward(hidden_states, wp_t, bp_2d, wfc_t, bfc_p,
                              n_classes=n_classes)
    logits = jax.block_until_ready(logits)

    ref = reference_forward(hidden_states, wp, bp, wfc, bfc)
    assert logits.shape == (B, n_classes)
    # bf16 pooler weight -> relaxed tolerance vs the pure-f32 reference.
    max_err = float(jnp.max(jnp.abs(logits - ref)))
    assert jnp.allclose(logits, ref, atol=5e-2, rtol=5e-2), max_err

    print("KERNEL_OK")
</pallas_src>

<mosaic_0001>
module attributes {stable_mosaic.version = 11 : i64} {
  func.func @bert_cls_kernel(%arg0: i32, %arg1: memref<8x768xf32, #tpu.memory_space<vmem>>, %arg2: memref<768x768xbf16, #tpu.memory_space<vmem>>, %arg3: memref<1x768xf32, #tpu.memory_space<vmem>>, %arg4: memref<768x128xf32, #tpu.memory_space<vmem>>, %arg5: memref<1x128xf32, #tpu.memory_space<vmem>>, %arg6: memref<8x128xf32, #tpu.memory_space<vmem>>) attributes {dimension_semantics = [#tpu.dimension_semantics<arbitrary>], iteration_bounds = array<i64: 1>, scalar_prefetch = 0 : i64, scratch_operands = 0 : i64, tpu.core_type = #tpu.core_type<tc>, window_params = [{pipeline_mode = #tpu.pipeline_mode<synchronous>, transform_indices = @transform_0, window_bounds = array<i64: 8, 768>}, {pipeline_mode = #tpu.pipeline_mode<synchronous>, transform_indices = @transform_1, window_bounds = array<i64: 768, 768>}, {pipeline_mode = #tpu.pipeline_mode<synchronous>, transform_indices = @transform_2, window_bounds = array<i64: 1, 768>}, {pipeline_mode = #tpu.pipeline_mode<synchronous>, transform_indices = @transform_3, window_bounds = array<i64: 768, 128>}, {pipeline_mode = #tpu.pipeline_mode<synchronous>, transform_indices = @transform_4, window_bounds = array<i64: 1, 128>}, {pipeline_mode = #tpu.pipeline_mode<synchronous>, transform_indices = @transform_5, window_bounds = array<i64: 8, 128>}]} {
    %c0 = arith.constant 0 : index
    %c0_0 = arith.constant 0 : index
    %0 = vector.load %arg1[%c0, %c0_0] : memref<8x768xf32, #tpu.memory_space<vmem>>, vector<8x768xf32>
    %1 = arith.truncf %0 : vector<8x768xf32> to vector<8x768xbf16>
    %c0_1 = arith.constant 0 : index
    %c0_2 = arith.constant 0 : index
    %2 = vector.load %arg2[%c0_1, %c0_2] : memref<768x768xbf16, #tpu.memory_space<vmem>>, vector<768x768xbf16>
    %cst = arith.constant dense<0.000000e+00> : vector<8x768xf32>
    %3 = tpu.matmul %1, %2, %cst {dimension_numbers = #tpu.dot_dimension_numbers<[1], [0], [0], [1], [0, 0, 1, 1], [], []>} : vector<8x768xbf16>, vector<768x768xbf16>, vector<8x768xf32> -> vector<8x768xf32>
    %c0_3 = arith.constant 0 : index
    %c0_4 = arith.constant 0 : index
    %4 = vector.load %arg3[%c0_3, %c0_4] : memref<1x768xf32, #tpu.memory_space<vmem>>, vector<1x768xf32>
    %5 = vector.broadcast %4 : vector<1x768xf32> to vector<8x768xf32>
    %6 = arith.addf %3, %5 : vector<8x768xf32>
    %7 = math.tanh %6 : vector<8x768xf32>
    %c0_5 = arith.constant 0 : index
    %c0_6 = arith.constant 0 : index
    %8 = vector.load %arg4[%c0_5, %c0_6] : memref<768x128xf32, #tpu.memory_space<vmem>>, vector<768x128xf32>
    %cst_7 = arith.constant dense<0.000000e+00> : vector<8x128xf32>
    %9 = tpu.matmul %7, %8, %cst_7 {dimension_numbers = #tpu.dot_dimension_numbers<[1], [0], [0], [1], [0, 0, 1, 1], [], []>} : vector<8x768xf32>, vector<768x128xf32>, vector<8x128xf32> -> vector<8x128xf32>
    %c0_8 = arith.constant 0 : index
    %c0_9 = arith.constant 0 : index
    %10 = vector.load %arg5[%c0_8, %c0_9] : memref<1x128xf32, #tpu.memory_space<vmem>>, vector<1x128xf32>
    %11 = vector.broadcast %10 : vector<1x128xf32> to vector<8x128xf32>
    %12 = arith.addf %9, %11 : vector<8x128xf32>
    %c0_10 = arith.constant 0 : index
    %c0_11 = arith.constant 0 : index
    %13 = vector.load %arg6[%c0_10, %c0_11] : memref<8x128xf32, #tpu.memory_space<vmem>>, vector<8x128xf32>
    tpu.vector_store %arg6[%c0_10, %c0_11], %12 {strides = array<i32>} : memref<8x128xf32, #tpu.memory_space<vmem>>, vector<8x128xf32>,
    return
  }
  func.func @transform_0(%arg0: i32) -> (i32, i32) {
    %c0_i32 = arith.constant 0 : i32
    %c0_i32_0 = arith.constant 0 : i32
    %c0_i32_1 = arith.constant 0 : i32
    return %c0_i32, %c0_i32_0 : i32, i32
  }
  func.func @transform_1(%arg0: i32) -> (i32, i32) {
    %c0_i32 = arith.constant 0 : i32
    %c0_i32_0 = arith.constant 0 : i32
    %c0_i32_1 = arith.constant 0 : i32
    return %c0_i32, %c0_i32_0 : i32, i32
  }
  func.func @transform_2(%arg0: i32) -> (i32, i32) {
    %c0_i32 = arith.constant 0 : i32
    %c0_i32_0 = arith.constant 0 : i32
    %c0_i32_1 = arith.constant 0 : i32
    return %c0_i32, %c0_i32_0 : i32, i32
  }
  func.func @transform_3(%arg0: i32) -> (i32, i32) {
    %c0_i32 = arith.constant 0 : i32
    %c0_i32_0 = arith.constant 0 : i32
    %c0_i32_1 = arith.constant 0 : i32
    return %c0_i32, %c0_i32_0 : i32, i32
  }
  func.func @transform_4(%arg0: i32) -> (i32, i32) {
    %c0_i32 = arith.constant 0 : i32
    %c0_i32_0 = arith.constant 0 : i32
    %c0_i32_1 = arith.constant 0 : i32
    return %c0_i32, %c0_i32_0 : i32, i32
  }
  func.func @transform_5(%arg0: i32) -> (i32, i32) {
    %c0_i32 = arith.constant 0 : i32
    %c0_i32_0 = arith.constant 0 : i32
    %c0_i32_1 = arith.constant 0 : i32
    return %c0_i32, %c0_i32_0 : i32, i32
  }
}

</mosaic_0001>

<llo_original>
// kernel: bert_cls_forward.1
$region0: #{bert_cls_forward.1}
  #allocation0 [shape = 'u32[]', space=smem, size = 0x4, offset = 0x4, fixed_abs, tag = 'smem constant byte address 0x4 - core index']
  #allocation1 [shape = 'u32[72,128]{1,0:T(1,128)}', space=vmem, size = 0x9000, scoped, tag = 'internal scratch']
  %s0 = inlined_call_operand.vmem [shape: f32[8,768], index: 0, kind: input, shape index: {}]
  %s1 = inlined_call_operand.hbm [shape: bf16[768,768], index: 1, kind: input, shape index: {}]
  %s2 = inlined_call_operand.hbm [shape: f32[1,768], index: 2, kind: input, shape index: {}]
  %s3 = inlined_call_operand.hbm [shape: f32[768,128], index: 3, kind: input, shape index: {}]
  %s4 = inlined_call_operand.hbm [shape: f32[1,128], index: 4, kind: input, shape index: {}]
  %s5 = inlined_call_operand.vmem [shape: f32[8,128], index: 5, kind: output, shape index: {}]
  %s6 = sld [smem:[#allocation0]]
  $region46: #{bert_cls_forward.1} parent=0
    _
  %s8 = ssub.s32 1, %s6
  %s9 = scalar_select 0, %s8, %s6
  $region1: #{bert_cls_forward.1} parent=0
    #allocation2 [shape = 'u8[1179648]{0}', space=vmem, size = 0x120000, scoped, tag = 'input window, operand 1, single buffered']
    #allocation3 [shape = 's32[1]{0}', space=sflag, size = 0x4, scoped, tag = 'scoped memory for bert_cls_forward.1']
    #allocation4 [shape = 'u8[3072]{0}', space=vmem, size = 0xc00, scoped, tag = 'input window, operand 2, single buffered']
    #allocation5 [shape = 's32[1]{0}', space=sflag, size = 0x4, scoped, tag = 'scoped memory for bert_cls_forward.1']
    #allocation6 [shape = 'u8[393216]{0}', space=vmem, size = 0x60000, scoped, tag = 'input window, operand 3, single buffered']
    #allocation7 [shape = 'u8[512]{0}', space=vmem, size = 0x400, scoped, tag = 'input window, operand 4, single buffered']
    #allocation8 [shape = 's32[1]{0}', space=sflag, size = 0x4, scoped, tag = 'scoped memory for bert_cls_forward.1']
    %10 = vsyncpa [#allocation3], 0
    %11 = vsyncpa [#allocation5], 0
    %12 = vsyncpa [#allocation8], 0
    // Predicated region
    $region2: #{bert_cls_forward.1} parent=1 // pred_check
      _
    $region3: #{bert_cls_forward.1} parent=1 // pred_check_branch
      %14 = sbr.rel (0) target = $region5
    $region4: #{bert_cls_forward.1} parent=1 // pred_region
      _
    $region5: #{bert_cls_forward.1} parent=1 // pred_fallthru
      _
    // Predicated region
    $region6: #{bert_cls_forward.1} parent=1 // pred_check
      _
    $region7: #{bert_cls_forward.1} parent=1 // pred_check_branch
      %16 = sbr.rel (0) target = $region9
    $region8: #{bert_cls_forward.1} parent=1 // pred_region
      %18 = vsyncadd [#allocation3], 0
      %s19 = sshll.u32 %s1, 4
      %s20 = int_to_ptr.hbm [resolvable:$true] %s19
      %s21 = sshll.u32 [#allocation2], 4
      %s22 = int_to_ptr.vmem [resolvable:$true] %s21
      %27 = dma.hbm_to_vmem [thread:$0]  %s20, 36864, %s22, [#allocation3], 384, 384, 24
    $region9: #{bert_cls_forward.1} parent=1 // pred_fallthru
      _
    // Predicated region
    $region10: #{bert_cls_forward.1} parent=1 // pred_check
      _
    $region11: #{bert_cls_forward.1} parent=1 // pred_check_branch
      %29 = sbr.rel (0) target = $region13
    $region12: #{bert_cls_forward.1} parent=1 // pred_region
      %31 = vsyncadd [#allocation5], 0
      %s33 = sshll.u32 %s2, 4
      %s34 = int_to_ptr.hbm [resolvable:$true] %s33
      %s35 = sshll.u32 [#allocation4], 4
      %s36 = int_to_ptr.vmem [resolvable:$true] %s35
      %38 = dma.hbm_to_vmem [thread:$0]  %s34, 96, %s36, [#allocation5]
    $region13: #{bert_cls_forward.1} parent=1 // pred_fallthru
      _
    // Predicated region
    $region14: #{bert_cls_forward.1} parent=1 // pred_check
      _
    $region15: #{bert_cls_forward.1} parent=1 // pred_check_branch
      %40 = sbr.rel (0) target = $region17
    $region16: #{bert_cls_forward.1} parent=1 // pred_region
      %42 = vsyncadd [#allocation5], 0
      %s43 = sshll.u32 %s3, 4
      %s44 = int_to_ptr.hbm [resolvable:$true] %s43
      %s45 = sshll.u32 [#allocation6], 4
      %s46 = int_to_ptr.vmem [resolvable:$true] %s45
      %51 = dma.hbm_to_vmem [thread:$0]  %s44, 12288, %s46, [#allocation5], 128, 128, 8
    $region17: #{bert_cls_forward.1} parent=1 // pred_fallthru
      _
    // Predicated region
    $region18: #{bert_cls_forward.1} parent=1 // pred_check
      _
    $region19: #{bert_cls_forward.1} parent=1 // pred_check_branch
      %53 = sbr.rel (0) target = $region21
    $region20: #{bert_cls_forward.1} parent=1 // pred_region
      %55 = vsyncadd [#allocation8], 0
      %s57 = sshll.u32 %s4, 4
      %s58 = int_to_ptr.hbm [resolvable:$true] %s57
      %s59 = sshll.u32 [#allocation7], 4
      %s60 = int_to_ptr.vmem [resolvable:$true] %s59
      %62 = dma.hbm_to_vmem [thread:$0]  %s58, 16, %s60, [#allocation8]
    $region21: #{bert_cls_forward.1} parent=1 // pred_fallthru
      _
    // Predicated region
    $region22: #{bert_cls_forward.1} parent=1 // pred_check
      _
    $region23: #{bert_cls_forward.1} parent=1 // pred_check_branch
      %64 = sbr.rel (0) target = $region25
    $region24: #{bert_cls_forward.1} parent=1 // pred_region
      %66 = dma.done [#allocation3], 36864
    $region25: #{bert_cls_forward.1} parent=1 // pred_fallthru
      _
    // Predicated region
    $region26: #{bert_cls_forward.1} parent=1 // pred_check
      _
    $region27: #{bert_cls_forward.1} parent=1 // pred_check_branch
      %68 = sbr.rel (0) target = $region29
    $region28: #{bert_cls_forward.1} parent=1 // pred_region
      %70 = dma.done [#allocation5], 96
    $region29: #{bert_cls_forward.1} parent=1 // pred_fallthru
      _
    // Predicated region
    $region30: #{bert_cls_forward.1} parent=1 // pred_check
      _
    $region31: #{bert_cls_forward.1} parent=1 // pred_check_branch
      %72 = sbr.rel (0) target = $region33
    $region32: #{bert_cls_forward.1} parent=1 // pred_region
      %74 = dma.done [#allocation5], 12288
    $region33: #{bert_cls_forward.1} parent=1 // pred_fallthru
      _
    // Predicated region
    $region34: #{bert_cls_forward.1} parent=1 // pred_check
      _
    $region35: #{bert_cls_forward.1} parent=1 // pred_check_branch
      %76 = sbr.rel (0) target = $region37
    $region36: #{bert_cls_forward.1} parent=1 // pred_region
      %78 = dma.done [#allocation8], 16
    $region37: #{bert_cls_forward.1} parent=1 // pred_fallthru
      _
    %v79 = vld [vmem:[%s0] sm:$0xff]
    %v80 = vld [vmem:[%s0 + $0x8] sm:$0xff]
    %v81 = vld [vmem:[%s0 + $0x10] sm:$0xff]
    %v82 = vld [vmem:[%s0 + $0x18] sm:$0xff]
    %v83 = vld [vmem:[%s0 + $0x20] sm:$0xff]
    %v84 = vld [vmem:[%s0 + $0x28] sm:$0xff]
    %v85 = vpack.c.bf16 %v79, %v79
    %v86 = vpack.c.bf16 %v80, %v80
    %v87 = vpack.c.bf16 %v81, %v81
    %v88 = vpack.c.bf16 %v82, %v82
    %v89 = vpack.c.bf16 %v83, %v83
    %v90 = vpack.c.bf16 %v84, %v84
    %v91 = vld [vmem:[#allocation2] sm:$0xff]
    %v92 = vld [vmem:[#allocation2 + $0x8] sm:$0xff]
    %v93 = vld [vmem:[#allocation2 + $0x10] sm:$0xff]
    %v94 = vld [vmem:[#allocation2 + $0x18] sm:$0xff]
    %v95 = vld [vmem:[#allocation2 + $0x20] sm:$0xff]
    %v96 = vld [vmem:[#allocation2 + $0x28] sm:$0xff]
    %v97 = vld [vmem:[#allocation2 + $0x30] sm:$0xff]
    %v98 = vld [vmem:[#allocation2 + $0x38] sm:$0xff]
    %v99 = vld [vmem:[#allocation2 + $0x40] sm:$0xff]
    %v100 = vld [vmem:[#allocation2 + $0x48] sm:$0xff]
    %v101 = vld [vmem:[#allocation2 + $0x50] sm:$0xff]
    %v102 = vld [vmem:[#allocation2 + $0x58] sm:$0xff]
    %v103 = vld [vmem:[#allocation2 + $0x60] sm:$0xff]
    %v104 = vld [vmem:[#allocation2 + $0x68] sm:$0xff]
    %v105 = vld [vmem:[#allocation2 + $0x70] sm:$0xff]
    %v106 = vld [vmem:[#allocation2 + $0x78] sm:$0xff]
    %v107 = vld [vmem:[#allocation2 + $0x80] sm:$0xff]
    %v108 = vld [vmem:[#allocation2 + $0x88] sm:$0xff]
    %v109 = vld [vmem:[#allocation2 + $0x90] sm:$0xff]
    %v110 = vld [vmem:[#allocation2 + $0x98] sm:$0xff]
    %v111 = vld [vmem:[#allocation2 + $0xa0] sm:$0xff]
    %v112 = vld [vmem:[#allocation2 + $0xa8] sm:$0xff]
    %v113 = vld [vmem:[#allocation2 + $0xb0] sm:$0xff]
    %v114 = vld [vmem:[#allocation2 + $0xb8] sm:$0xff]
    %v115 = vld [vmem:[#allocation2 + $0xc0] sm:$0xff]
    %v116 = vld [vmem:[#allocation2 + $0xc8] sm:$0xff]
    %v117 = vld [vmem:[#allocation2 + $0xd0] sm:$0xff]
    %v118 = vld [vmem:[#allocation2 + $0xd8] sm:$0xff]
    %v119 = vld [vmem:[#allocation2 + $0xe0] sm:$0xff]
    %v120 = vld [vmem:[#allocation2 + $0xe8] sm:$0xff]
    %v121 = vld [vmem:[#allocation2 + $0xf0] sm:$0xff]
    %v122 = vld [vmem:[#allocation2 + $0xf8] sm:$0xff]
    %v123 = vld [vmem:[#allocation2 + $0x100] sm:$0xff]
    %v124 = vld [vmem:[#allocation2 + $0x108] sm:$0xff]
    %v125 = vld [vmem:[#allocation2 + $0x110] sm:$0xff]
    %v126 = vld [vmem:[#allocation2 + $0x118] sm:$0xff]
    %v127 = vld [vmem:[#allocation2 + $0x120] sm:$0xff]
    %v128 = vld [vmem:[#allocation2 + $0x128] sm:$0xff]
    %v129 = vld [vmem:[#allocation2 + $0x130] sm:$0xff]
    %v130 = vld [vmem:[#allocation2 + $0x138] sm:$0xff]
    %v131 = vld [vmem:[#allocation2 + $0x140] sm:$0xff]
    %v132 = vld [vmem:[#allocation2 + $0x148] sm:$0xff]
    %v133 = vld [vmem:[#allocation2 + $0x150] sm:$0xff]
    %v134 = vld [vmem:[#allocation2 + $0x158] sm:$0xff]
    %v135 = vld [vmem:[#allocation2 + $0x160] sm:$0xff]
    %v136 = vld [vmem:[#allocation2 + $0x168] sm:$0xff]
    %v137 = vld [vmem:[#allocation2 + $0x170] sm:$0xff]
    %v138 = vld [vmem:[#allocation2 + $0x178] sm:$0xff]
    %v139 = vld [vmem:[#allocation2 + $0x180] sm:$0xff]
    %v140 = vld [vmem:[#allocation2 + $0x188] sm:$0xff]
    %v141 = vld [vmem:[#allocation2 + $0x190] sm:$0xff]
    %v142 = vld [vmem:[#allocation2 + $0x198] sm:$0xff]
    %v143 = vld [vmem:[#allocation2 + $0x1a0] sm:$0xff]
    %v144 = vld [vmem:[#allocation2 + $0x1a8] sm:$0xff]
    %v145 = vld [vmem:[#allocation2 + $0x1b0] sm:$0xff]
    %v146 = vld [vmem:[#allocation2 + $0x1b8] sm:$0xff]
    %v147 = vld [vmem:[#allocation2 + $0x1c0] sm:$0xff]
    %v148 = vld [vmem:[#allocation2 + $0x1c8] sm:$0xff]
    %v149 = vld [vmem:[#allocation2 + $0x1d0] sm:$0xff]
    %v150 = vld [vmem:[#allocation2 + $0x1d8] sm:$0xff]
    %v151 = vld [vmem:[#allocation2 + $0x1e0] sm:$0xff]
    %v152 = vld [vmem:[#allocation2 + $0x1e8] sm:$0xff]
    %v153 = vld [vmem:[#allocation2 + $0x1f0] sm:$0xff]
    %v154 = vld [vmem:[#allocation2 + $0x1f8] sm:$0xff]
    %v155 = vld [vmem:[#allocation2 + $0x200] sm:$0xff]
    %v156 = vld [vmem:[#allocation2 + $0x208] sm:$0xff]
    %v157 = vld [vmem:[#allocation2 + $0x210] sm:$0xff]
    %v158 = vld [vmem:[#allocation2 + $0x218] sm:$0xff]
    %v159 = vld [vmem:[#allocation2 + $0x220] sm:$0xff]
    %v160 = vld [vmem:[#allocation2 + $0x228] sm:$0xff]
    %v161 = vld [vmem:[#allocation2 + $0x230] sm:$0xff]
    %v162 = vld [vmem:[#allocation2 + $0x238] sm:$0xff]
    %v163 = vld [vmem:[#allocation2 + $0x240] sm:$0xff]
    %v164 = vld [vmem:[#allocation2 + $0x248] sm:$0xff]
    %v165 = vld [vmem:[#allocation2 + $0x250] sm:$0xff]
    %v166 = vld [vmem:[#allocation2 + $0x258] sm:$0xff]
    %v167 = vld [vmem:[#allocation2 + $0x260] sm:$0xff]
    %v168 = vld [vmem:[#allocation2 + $0x268] sm:$0xff]
    %v169 = vld [vmem:[#allocation2 + $0x270] sm:$0xff]
    %v170 = vld [vmem:[#allocation2 + $0x278] sm:$0xff]
    %v171 = vld [vmem:[#allocation2 + $0x280] sm:$0xff]
    %v172 = vld [vmem:[#allocation2 + $0x288] sm:$0xff]
    %v173 = vld [vmem:[#allocation2 + $0x290] sm:$0xff]
    %v174 = vld [vmem:[#allocation2 + $0x298] sm:$0xff]
    %v175 = vld [vmem:[#allocation2 + $0x2a0] sm:$0xff]
    %v176 = vld [vmem:[#allocation2 + $0x2a8] sm:$0xff]
    %v177 = vld [vmem:[#allocation2 + $0x2b0] sm:$0xff]
    %v178 = vld [vmem:[#allocation2 + $0x2b8] sm:$0xff]
    %v179 = vld [vmem:[#allocation2 + $0x2c0] sm:$0xff]
    %v180 = vld [vmem:[#allocation2 + $0x2c8] sm:$0xff]
    %v181 = vld [vmem:[#allocation2 + $0x2d0] sm:$0xff]
    %v182 = vld [vmem:[#allocation2 + $0x2d8] sm:$0xff]
    %v183 = vld [vmem:[#allocation2 + $0x2e0] sm:$0xff]
    %v184 = vld [vmem:[#allocation2 + $0x2e8] sm:$0xff]
    %v185 = vld [vmem:[#allocation2 + $0x2f0] sm:$0xff]
    %v186 = vld [vmem:[#allocation2 + $0x2f8] sm:$0xff]
    %v187 = vld [vmem:[#allocation2 + $0x300] sm:$0xff]
    %v188 = vld [vmem:[#allocation2 + $0x308] sm:$0xff]
    %v189 = vld [vmem:[#allocation2 + $0x310] sm:$0xff]
    %v190 = vld [vmem:[#allocation2 + $0x318] sm:$0xff]
    %v191 = vld [vmem:[#allocation2 + $0x320] sm:$0xff]
    %v192 = vld [vmem:[#allocation2 + $0x328] sm:$0xff]
    %v193 = vld [vmem:[#allocation2 + $0x330] sm:$0xff]
    %v194 = vld [vmem:[#allocation2 + $0x338] sm:$0xff]
    %v195 = vld [vmem:[#allocation2 + $0x340] sm:$0xff]
    %v196 = vld [vmem:[#allocation2 + $0x348] sm:$0xff]
    %v197 = vld [vmem:[#allocation2 + $0x350] sm:$0xff]
    %v198 = vld [vmem:[#allocation2 + $0x358] sm:$0xff]
    %v199 = vld [vmem:[#allocation2 + $0x360] sm:$0xff]
    %v200 = vld [vmem:[#allocation2 + $0x368] sm:$0xff]
    %v201 = vld [vmem:[#allocation2 + $0x370] sm:$0xff]
    %v202 = vld [vmem:[#allocation2 + $0x378] sm:$0xff]
    %v203 = vld [vmem:[#allocation2 + $0x380] sm:$0xff]
    %v204 = vld [vmem:[#allocation2 + $0x388] sm:$0xff]
    %v205 = vld [vmem:[#allocation2 + $0x390] sm:$0xff]
    %v206 = vld [vmem:[#allocation2 + $0x398] sm:$0xff]
    %v207 = vld [vmem:[#allocation2 + $0x3a0] sm:$0xff]
    %v208 = vld [vmem:[#allocation2 + $0x3a8] sm:$0xff]
    %v209 = vld [vmem:[#allocation2 + $0x3b0] sm:$0xff]
    %v210 = vld [vmem:[#allocation2 + $0x3b8] sm:$0xff]
    %v211 = vld [vmem:[#allocation2 + $0x3c0] sm:$0xff]
    %v212 = vld [vmem:[#allocation2 + $0x3c8] sm:$0xff]
    %v213 = vld [vmem:[#allocation2 + $0x3d0] sm:$0xff]
    %v214 = vld [vmem:[#allocation2 + $0x3d8] sm:$0xff]
    %v215 = vld [vmem:[#allocation2 + $0x3e0] sm:$0xff]
    %v216 = vld [vmem:[#allocation2 + $0x3e8] sm:$0xff]
    %v217 = vld [vmem:[#allocation2 + $0x3f0] sm:$0xff]
    %v218 = vld [vmem:[#allocation2 + $0x3f8] sm:$0xff]
    %v219 = vld [vmem:[#allocation2 + $0x400] sm:$0xff]
    %v220 = vld [vmem:[#allocation2 + $0x408] sm:$0xff]
    %v221 = vld [vmem:[#allocation2 + $0x410] sm:$0xff]
    %v222 = vld [vmem:[#allocation2 + $0x418] sm:$0xff]
    %v223 = vld [vmem:[#allocation2 + $0x420] sm:$0xff]
    %v224 = vld [vmem:[#allocation2 + $0x428] sm:$0xff]
    %v225 = vld [vmem:[#allocation2 + $0x430] sm:$0xff]
    %v226 = vld [vmem:[#allocation2 + $0x438] sm:$0xff]
    %v227 = vld [vmem:[#allocation2 + $0x440] sm:$0xff]
    %v228 = vld [vmem:[#allocation2 + $0x448] sm:$0xff]
    %v229 = vld [vmem:[#allocation2 + $0x450] sm:$0xff]
    %v230 = vld [vmem:[#allocation2 + $0x458] sm:$0xff]
    %v231 = vld [vmem:[#allocation2 + $0x460] sm:$0xff]
    %v232 = vld [vmem:[#allocation2 + $0x468] sm:$0xff]
    %v233 = vld [vmem:[#allocation2 + $0x470] sm:$0xff]
    %v234 = vld [vmem:[#allocation2 + $0x478] sm:$0xff]
    %v235 = vld [vmem:[#allocation2 + $0x480] sm:$0xff]
    %v236 = vld [vmem:[#allocation2 + $0x488] sm:$0xff]
    %v237 = vld [vmem:[#allocation2 + $0x490] sm:$0xff]
    %v238 = vld [vmem:[#allocation2 + $0x498] sm:$0xff]
    %v239 = vld [vmem:[#allocation2 + $0x4a0] sm:$0xff]
    %v240 = vld [vmem:[#allocation2 + $0x4a8] sm:$0xff]
    %v241 = vld [vmem:[#allocation2 + $0x4b0] sm:$0xff]
    %v242 = vld [vmem:[#allocation2 + $0x4b8] sm:$0xff]
    %v243 = vld [vmem:[#allocation2 + $0x4c0] sm:$0xff]
    %v244 = vld [vmem:[#allocation2 + $0x4c8] sm:$0xff]
    %v245 = vld [vmem:[#allocation2 + $0x4d0] sm:$0xff]
    %v246 = vld [vmem:[#allocation2 + $0x4d8] sm:$0xff]
    %v247 = vld [vmem:[#allocation2 + $0x4e0] sm:$0xff]
    %v248 = vld [vmem:[#allocation2 + $0x4e8] sm:$0xff]
    %v249 = vld [vmem:[#allocation2 + $0x4f0] sm:$0xff]
    %v250 = vld [vmem:[#allocation2 + $0x4f8] sm:$0xff]
    %v251 = vld [vmem:[#allocation2 + $0x500] sm:$0xff]
    %v252 = vld [vmem:[#allocation2 + $0x508] sm:$0xff]
    %v253 = vld [vmem:[#allocation2 + $0x510] sm:$0xff]
    %v254 = vld [vmem:[#allocation2 + $0x518] sm:$0xff]
    %v255 = vld [vmem:[#allocation2 + $0x520] sm:$0xff]
    %v256 = vld [vmem:[#allocation2 + $0x528] sm:$0xff]
    %v257 = vld [vmem:[#allocation2 + $0x530] sm:$0xff]
    %v258 = vld [vmem:[#allocation2 + $0x538] sm:$0xff]
    %v259 = vld [vmem:[#allocation2 + $0x540] sm:$0xff]
    %v260 = vld [vmem:[#allocation2 + $0x548] sm:$0xff]
    %v261 = vld [vmem:[#allocation2 + $0x550] sm:$0xff]
    %v262 = vld [vmem:[#allocation2 + $0x558] sm:$0xff]
    %v263 = vld [vmem:[#allocation2 + $0x560] sm:$0xff]
    %v264 = vld [vmem:[#allocation2 + $0x568] sm:$0xff]
    %v265 = vld [vmem:[#allocation2 + $0x570] sm:$0xff]
    %v266 = vld [vmem:[#allocation2 + $0x578] sm:$0xff]
    %v267 = vld [vmem:[#allocation2 + $0x580] sm:$0xff]
    %v268 = vld [vmem:[#allocation2 + $0x588] sm:$0xff]
    %v269 = vld [vmem:[#allocation2 + $0x590] sm:$0xff]
    %v270 = vld [vmem:[#allocation2 + $0x598] sm:$0xff]
    %v271 = vld [vmem:[#allocation2 + $0x5a0] sm:$0xff]
    %v272 = vld [vmem:[#allocation2 + $0x5a8] sm:$0xff]
    %v273 = vld [vmem:[#allocation2 + $0x5b0] sm:$0xff]
    %v274 = vld [vmem:[#allocation2 + $0x5b8] sm:$0xff]
    %v275 = vld [vmem:[#allocation2 + $0x5c0] sm:$0xff]
    %v276 = vld [vmem:[#allocation2 + $0x5c8] sm:$0xff]
    %v277 = vld [vmem:[#allocation2 + $0x5d0] sm:$0xff]
    %v278 = vld [vmem:[#allocation2 + $0x5d8] sm:$0xff]
    %v279 = vld [vmem:[#allocation2 + $0x5e0] sm:$0xff]
    %v280 = vld [vmem:[#allocation2 + $0x5e8] sm:$0xff]
    %v281 = vld [vmem:[#allocation2 + $0x5f0] sm:$0xff]
    %v282 = vld [vmem:[#allocation2 + $0x5f8] sm:$0xff]
    %v283 = vld [vmem:[#allocation2 + $0x600] sm:$0xff]
    %v284 = vld [vmem:[#allocation2 + $0x608] sm:$0xff]
    %v285 = vld [vmem:[#allocation2 + $0x610] sm:$0xff]
    %v286 = vld [vmem:[#allocation2 + $0x618] sm:$0xff]
    %v287 = vld [vmem:[#allocation2 + $0x620] sm:$0xff]
    %v288 = vld [vmem:[#allocation2 + $0x628] sm:$0xff]
    %v289 = vld [vmem:[#allocation2 + $0x630] sm:$0xff]
    %v290 = vld [vmem:[#allocation2 + $0x638] sm:$0xff]
    %v291 = vld [vmem:[#allocation2 + $0x640] sm:$0xff]
    %v292 = vld [vmem:[#allocation2 + $0x648] sm:$0xff]
    %v293 = vld [vmem:[#allocation2 + $0x650] sm:$0xff]
    %v294 = vld [vmem:[#allocation2 + $0x658] sm:$0xff]
    %v295 = vld [vmem:[#allocation2 + $0x660] sm:$0xff]
    %v296 = vld [vmem:[#allocation2 + $0x668] sm:$0xff]
    %v297 = vld [vmem:[#allocation2 + $0x670] sm:$0xff]
    %v298 = vld [vmem:[#allocation2 + $0x678] sm:$0xff]
    %v299 = vld [vmem:[#allocation2 + $0x680] sm:$0xff]
    %v300 = vld [vmem:[#allocation2 + $0x688] sm:$0xff]
    %v301 = vld [vmem:[#allocation2 + $0x690] sm:$0xff]
    %v302 = vld [vmem:[#allocation2 + $0x698] sm:$0xff]
    %v303 = vld [vmem:[#allocation2 + $0x6a0] sm:$0xff]
    %v304 = vld [vmem:[#allocation2 + $0x6a8] sm:$0xff]
    %v305 = vld [vmem:[#allocation2 + $0x6b0] sm:$0xff]
    %v306 = vld [vmem:[#allocation2 + $0x6b8] sm:$0xff]
    %v307 = vld [vmem:[#allocation2 + $0x6c0] sm:$0xff]
    %v308 = vld [vmem:[#allocation2 + $0x6c8] sm:$0xff]
    %v309 = vld [vmem:[#allocation2 + $0x6d0] sm:$0xff]
    %v310 = vld [vmem:[#allocation2 + $0x6d8] sm:$0xff]
    %v311 = vld [vmem:[#allocation2 + $0x6e0] sm:$0xff]
    %v312 = vld [vmem:[#allocation2 + $0x6e8] sm:$0xff]
    %v313 = vld [vmem:[#allocation2 + $0x6f0] sm:$0xff]
    %v314 = vld [vmem:[#allocation2 + $0x6f8] sm:$0xff]
    %v315 = vld [vmem:[#allocation2 + $0x700] sm:$0xff]
    %v316 = vld [vmem:[#allocation2 + $0x708] sm:$0xff]
    %v317 = vld [vmem:[#allocation2 + $0x710] sm:$0xff]
    %v318 = vld [vmem:[#allocation2 + $0x718] sm:$0xff]
    %v319 = vld [vmem:[#allocation2 + $0x720] sm:$0xff]
    %v320 = vld [vmem:[#allocation2 + $0x728] sm:$0xff]
    %v321 = vld [vmem:[#allocation2 + $0x730] sm:$0xff]
    %v322 = vld [vmem:[#allocation2 + $0x738] sm:$0xff]
    %v323 = vld [vmem:[#allocation2 + $0x740] sm:$0xff]
    %v324 = vld [vmem:[#allocation2 + $0x748] sm:$0xff]
    %v325 = vld [vmem:[#allocation2 + $0x750] sm:$0xff]
    %v326 = vld [vmem:[#allocation2 + $0x758] sm:$0xff]
    %v327 = vld [vmem:[#allocation2 + $0x760] sm:$0xff]
    %v328 = vld [vmem:[#allocation2 + $0x768] sm:$0xff]
    %v329 = vld [vmem:[#allocation2 + $0x770] sm:$0xff]
    %v330 = vld [vmem:[#allocation2 + $0x778] sm:$0xff]
    %v331 = vld [vmem:[#allocation2 + $0x780] sm:$0xff]
    %v332 = vld [vmem:[#allocation2 + $0x788] sm:$0xff]
    %v333 = vld [vmem:[#allocation2 + $0x790] sm:$0xff]
    %v334 = vld [vmem:[#allocation2 + $0x798] sm:$0xff]
    %v335 = vld [vmem:[#allocation2 + $0x7a0] sm:$0xff]
    %v336 = vld [vmem:[#allocation2 + $0x7a8] sm:$0xff]
    %v337 = vld [vmem:[#allocation2 + $0x7b0] sm:$0xff]
    %v338 = vld [vmem:[#allocation2 + $0x7b8] sm:$0xff]
    %v339 = vld [vmem:[#allocation2 + $0x7c0] sm:$0xff]
    %v340 = vld [vmem:[#allocation2 + $0x7c8] sm:$0xff]
    %v341 = vld [vmem:[#allocation2 + $0x7d0] sm:$0xff]
    %v342 = vld [vmem:[#allocation2 + $0x7d8] sm:$0xff]
    %v343 = vld [vmem:[#allocation2 + $0x7e0] sm:$0xff]
    %v344 = vld [vmem:[#allocation2 + $0x7e8] sm:$0xff]
    %v345 = vld [vmem:[#allocation2 + $0x7f0] sm:$0xff]
    %v346 = vld [vmem:[#allocation2 + $0x7f8] sm:$0xff]
    %v347 = vld [vmem:[#allocation2 + $0x800] sm:$0xff]
    %v348 = vld [vmem:[#allocation2 + $0x808] sm:$0xff]
    %v349 = vld [vmem:[#allocation2 + $0x810] sm:$0xff]
    %v350 = vld [vmem:[#allocation2 + $0x818] sm:$0xff]
    %v351 = vld [vmem:[#allocation2 + $0x820] sm:$0xff]
    %v352 = vld [vmem:[#allocation2 + $0x828] sm:$0xff]
    %v353 = vld [vmem:[#allocation2 + $0x830] sm:$0xff]
    %v354 = vld [vmem:[#allocation2 + $0x838] sm:$0xff]
    %v355 = vld [vmem:[#allocation2 + $0x840] sm:$0xff]
    %v356 = vld [vmem:[#allocation2 + $0x848] sm:$0xff]
    %v357 = vld [vmem:[#allocation2 + $0x850] sm:$0xff]
    %v358 = vld [vmem:[#allocation2 + $0x858] sm:$0xff]
    %v359 = vld [vmem:[#allocation2 + $0x860] sm:$0xff]
    %v360 = vld [vmem:[#allocation2 + $0x868] sm:$0xff]
    %v361 = vld [vmem:[#allocation2 + $0x870] sm:$0xff]
    %v362 = vld [vmem:[#allocation2 + $0x878] sm:$0xff]
    %v363 = vld [vmem:[#allocation2 + $0x880] sm:$0xff]
    %v364 = vld [vmem:[#allocation2 + $0x888] sm:$0xff]
    %v365 = vld [vmem:[#allocation2 + $0x890] sm:$0xff]
    %v366 = vld [vmem:[#allocation2 + $0x898] sm:$0xff]
    %v367 = vld [vmem:[#allocation2 + $0x8a0] sm:$0xff]
    %v368 = vld [vmem:[#allocation2 + $0x8a8] sm:$0xff]
    %v369 = vld [vmem:[#allocation2 + $0x8b0] sm:$0xff]
    %v370 = vld [vmem:[#allocation2 + $0x8b8] sm:$0xff]
    %v371 = vld [vmem:[#allocation2 + $0x8c0] sm:$0xff]
    %v372 = vld [vmem:[#allocation2 + $0x8c8] sm:$0xff]
    %v373 = vld [vmem:[#allocation2 + $0x8d0] sm:$0xff]
    %v374 = vld [vmem:[#allocation2 + $0x8d8] sm:$0xff]
    %v375 = vld [vmem:[#allocation2 + $0x8e0] sm:$0xff]
    %v376 = vld [vmem:[#allocation2 + $0x8e8] sm:$0xff]
    %v377 = vld [vmem:[#allocation2 + $0x8f0] sm:$0xff]
    %v378 = vld [vmem:[#allocation2 + $0x8f8] sm:$0xff]
    %v379 = vld [vmem:[#allocation4] sm:$0x3f]
    %v381 = vperm.slane %v379, 0
    %v382 = vperm.slane %v379, 1
    %v383 = vperm.slane %v379, 2
    %v384 = vperm.slane %v379, 3
    %v385 = vperm.slane %v379, 4
    %v386 = vperm.slane %v379, 5
    %v681 = vunpack.c.l.b16 %v91
    %v682 = vunpack.c.h.b16 %v91
    %v683 = vunpack.c.l.b16 %v92
    %v684 = vunpack.c.h.b16 %v92
    %v685 = vunpack.c.l.b16 %v93
    %v686 = vunpack.c.h.b16 %v93
    %v687 = vunpack.c.l.b16 %v94
    %v688 = vunpack.c.h.b16 %v94
    %v689 = vunpack.c.l.b16 %v95
    %v690 = vunpack.c.h.b16 %v95
    %v691 = vunpack.c.l.b16 %v96
    %v692 = vunpack.c.h.b16 %v96
    %v693 = vunpack.c.l.b16 %v97
    %v694 = vunpack.c.h.b16 %v97
    %v695 = vunpack.c.l.b16 %v98
    %v696 = vunpack.c.h.b16 %v98
    %v697 = vunpack.c.l.b16 %v99
    %v698 = vunpack.c.h.b16 %v99
    %v699 = vunpack.c.l.b16 %v100
    %v700 = vunpack.c.h.b16 %v100
    %v701 = vunpack.c.l.b16 %v101
    %v702 = vunpack.c.h.b16 %v101
    %v703 = vunpack.c.l.b16 %v102
    %v704 = vunpack.c.h.b16 %v102
    %v705 = vunpack.c.l.b16 %v103
    %v706 = vunpack.c.h.b16 %v103
    %v707 = vunpack.c.l.b16 %v104
    %v708 = vunpack.c.h.b16 %v104
    %v709 = vunpack.c.l.b16 %v105
    %v710 = vunpack.c.h.b16 %v105
    %v711 = vunpack.c.l.b16 %v106
    %v712 = vunpack.c.h.b16 %v106
    %v713 = vunpack.c.l.b16 %v107
    %v714 = vunpack.c.h.b16 %v107
    %v715 = vunpack.c.l.b16 %v108
    %v716 = vunpack.c.h.b16 %v108
    %v717 = vunpack.c.l.b16 %v109
    %v718 = vunpack.c.h.b16 %v109
    %v719 = vunpack.c.l.b16 %v110
    %v720 = vunpack.c.h.b16 %v110
    %v721 = vunpack.c.l.b16 %v111
    %v722 = vunpack.c.h.b16 %v111
    %v723 = vunpack.c.l.b16 %v112
    %v724 = vunpack.c.h.b16 %v112
    %v725 = vunpack.c.l.b16 %v113
    %v726 = vunpack.c.h.b16 %v113
    %v727 = vunpack.c.l.b16 %v114
    %v728 = vunpack.c.h.b16 %v114
    %v729 = vunpack.c.l.b16 %v115
    %v730 = vunpack.c.h.b16 %v115
    %v731 = vunpack.c.l.b16 %v116
    %v732 = vunpack.c.h.b16 %v116
    %v733 = vunpack.c.l.b16 %v117
    %v734 = vunpack.c.h.b16 %v117
    %v735 = vunpack.c.l.b16 %v118
    %v736 = vunpack.c.h.b16 %v118
    %v737 = vunpack.c.l.b16 %v119
    %v738 = vunpack.c.h.b16 %v119
    %v739 = vunpack.c.l.b16 %v120
    %v740 = vunpack.c.h.b16 %v120
    %v741 = vunpack.c.l.b16 %v121
    %v742 = vunpack.c.h.b16 %v121
    %v743 = vunpack.c.l.b16 %v122
    %v744 = vunpack.c.h.b16 %v122
    %v745 = vunpack.c.l.b16 %v123
    %v746 = vunpack.c.h.b16 %v123
    %v747 = vunpack.c.l.b16 %v124
    %v748 = vunpack.c.h.b16 %v124
    %v749 = vunpack.c.l.b16 %v125
    %v750 = vunpack.c.h.b16 %v125
    %v751 = vunpack.c.l.b16 %v126
    %v752 = vunpack.c.h.b16 %v126
    %v753 = vunpack.c.l.b16 %v127
    %v754 = vunpack.c.h.b16 %v127
    %v755 = vunpack.c.l.b16 %v128
    %v756 = vunpack.c.h.b16 %v128
    %v757 = vunpack.c.l.b16 %v129
    %v758 = vunpack.c.h.b16 %v129
    %v759 = vunpack.c.l.b16 %v130
    %v760 = vunpack.c.h.b16 %v130
    %v761 = vunpack.c.l.b16 %v131
    %v762 = vunpack.c.h.b16 %v131
    %v763 = vunpack.c.l.b16 %v132
    %v764 = vunpack.c.h.b16 %v132
    %v765 = vunpack.c.l.b16 %v133
    %v766 = vunpack.c.h.b16 %v133
    %v767 = vunpack.c.l.b16 %v134
    %v768 = vunpack.c.h.b16 %v134
    %v769 = vunpack.c.l.b16 %v135
    %v770 = vunpack.c.h.b16 %v135
    %v771 = vunpack.c.l.b16 %v136
    %v772 = vunpack.c.h.b16 %v136
    %v773 = vunpack.c.l.b16 %v137
    %v774 = vunpack.c.h.b16 %v137
    %v775 = vunpack.c.l.b16 %v138
    %v776 = vunpack.c.h.b16 %v138
    %v777 = vunpack.c.l.b16 %v139
    %v778 = vunpack.c.h.b16 %v139
    %v779 = vunpack.c.l.b16 %v140
    %v780 = vunpack.c.h.b16 %v140
    %v781 = vunpack.c.l.b16 %v141
    %v782 = vunpack.c.h.b16 %v141
    %v783 = vunpack.c.l.b16 %v142
    %v784 = vunpack.c.h.b16 %v142
    %v785 = vunpack.c.l.b16 %v143
    %v786 = vunpack.c.h.b16 %v143
    %v787 = vunpack.c.l.b16 %v144
    %v788 = vunpack.c.h.b16 %v144
    %v789 = vunpack.c.l.b16 %v145
    %v790 = vunpack.c.h.b16 %v145
    %v791 = vunpack.c.l.b16 %v146
    %v792 = vunpack.c.h.b16 %v146
    %v793 = vunpack.c.l.b16 %v147
    %v794 = vunpack.c.h.b16 %v147
    %v795 = vunpack.c.l.b16 %v148
    %v796 = vunpack.c.h.b16 %v148
    %v797 = vunpack.c.l.b16 %v149
    %v798 = vunpack.c.h.b16 %v149
    %v799 = vunpack.c.l.b16 %v150
    %v800 = vunpack.c.h.b16 %v150
    %v801 = vunpack.c.l.b16 %v151
    %v802 = vunpack.c.h.b16 %v151
    %v803 = vunpack.c.l.b16 %v152
    %v804 = vunpack.c.h.b16 %v152
    %v805 = vunpack.c.l.b16 %v153
    %v806 = vunpack.c.h.b16 %v153
    %v807 = vunpack.c.l.b16 %v154
    %v808 = vunpack.c.h.b16 %v154
    %v809 = vunpack.c.l.b16 %v155
    %v810 = vunpack.c.h.b16 %v155
    %v811 = vunpack.c.l.b16 %v156
    %v812 = vunpack.c.h.b16 %v156
    %v813 = vunpack.c.l.b16 %v157
    %v814 = vunpack.c.h.b16 %v157
    %v815 = vunpack.c.l.b16 %v158
    %v816 = vunpack.c.h.b16 %v158
    %v817 = vunpack.c.l.b16 %v159
    %v818 = vunpack.c.h.b16 %v159
    %v819 = vunpack.c.l.b16 %v160
    %v820 = vunpack.c.h.b16 %v160
    %v821 = vunpack.c.l.b16 %v161
    %v822 = vunpack.c.h.b16 %v161
    %v823 = vunpack.c.l.b16 %v162
    %v824 = vunpack.c.h.b16 %v162
    %v825 = vunpack.c.l.b16 %v163
    %v826 = vunpack.c.h.b16 %v163
    %v827 = vunpack.c.l.b16 %v164
    %v828 = vunpack.c.h.b16 %v164
    %v829 = vunpack.c.l.b16 %v165
    %v830 = vunpack.c.h.b16 %v165
    %v831 = vunpack.c.l.b16 %v166
    %v832 = vunpack.c.h.b16 %v166
    %v833 = vunpack.c.l.b16 %v167
    %v834 = vunpack.c.h.b16 %v167
    %v835 = vunpack.c.l.b16 %v168
    %v836 = vunpack.c.h.b16 %v168
    %v837 = vunpack.c.l.b16 %v169
    %v838 = vunpack.c.h.b16 %v169
    %v839 = vunpack.c.l.b16 %v170
    %v840 = vunpack.c.h.b16 %v170
    %v841 = vunpack.c.l.b16 %v171
    %v842 = vunpack.c.h.b16 %v171
    %v843 = vunpack.c.l.b16 %v172
    %v844 = vunpack.c.h.b16 %v172
    %v845 = vunpack.c.l.b16 %v173
    %v846 = vunpack.c.h.b16 %v173
    %v847 = vunpack.c.l.b16 %v174
    %v848 = vunpack.c.h.b16 %v174
    %v849 = vunpack.c.l.b16 %v175
    %v850 = vunpack.c.h.b16 %v175
    %v851 = vunpack.c.l.b16 %v176
    %v852 = vunpack.c.h.b16 %v176
    %v853 = vunpack.c.l.b16 %v177
    %v854 = vunpack.c.h.b16 %v177
    %v855 = vunpack.c.l.b16 %v178
    %v856 = vunpack.c.h.b16 %v178
    %v857 = vunpack.c.l.b16 %v179
    %v858 = vunpack.c.h.b16 %v179
    %v859 = vunpack.c.l.b16 %v180
    %v860 = vunpack.c.h.b16 %v180
    %v861 = vunpack.c.l.b16 %v181
    %v862 = vunpack.c.h.b16 %v181
    %v863 = vunpack.c.l.b16 %v182
    %v864 = vunpack.c.h.b16 %v182
    %v865 = vunpack.c.l.b16 %v183
    %v866 = vunpack.c.h.b16 %v183
    %v867 = vunpack.c.l.b16 %v184
    %v868 = vunpack.c.h.b16 %v184
    %v869 = vunpack.c.l.b16 %v185
    %v870 = vunpack.c.h.b16 %v185
    %v871 = vunpack.c.l.b16 %v186
    %v872 = vunpack.c.h.b16 %v186
    %v873 = vunpack.c.l.b16 %v187
    %v874 = vunpack.c.h.b16 %v187
    %v875 = vunpack.c.l.b16 %v188
    %v876 = vunpack.c.h.b16 %v188
    %v877 = vunpack.c.l.b16 %v189
    %v878 = vunpack.c.h.b16 %v189
    %v879 = vunpack.c.l.b16 %v190
    %v880 = vunpack.c.h.b16 %v190
    %v881 = vunpack.c.l.b16 %v191
    %v882 = vunpack.c.h.b16 %v191
    %v883 = vunpack.c.l.b16 %v192
    %v884 = vunpack.c.h.b16 %v192
    %v885 = vunpack.c.l.b16 %v193
    %v886 = vunpack.c.h.b16 %v193
    %v887 = vunpack.c.l.b16 %v194
    %v888 = vunpack.c.h.b16 %v194
    %v889 = vunpack.c.l.b16 %v195
    %v890 = vunpack.c.h.b16 %v195
    %v891 = vunpack.c.l.b16 %v196
    %v892 = vunpack.c.h.b16 %v196
    %v893 = vunpack.c.l.b16 %v197
    %v894 = vunpack.c.h.b16 %v197
    %v895 = vunpack.c.l.b16 %v198
    %v896 = vunpack.c.h.b16 %v198
    %v897 = vunpack.c.l.b16 %v199
    %v898 = vunpack.c.h.b16 %v199
    %v899 = vunpack.c.l.b16 %v200
    %v900 = vunpack.c.h.b16 %v200
    %v901 = vunpack.c.l.b16 %v201
    %v902 = vunpack.c.h.b16 %v201
    %v903 = vunpack.c.l.b16 %v202
    %v904 = vunpack.c.h.b16 %v202
    %v905 = vunpack.c.l.b16 %v203
    %v906 = vunpack.c.h.b16 %v203
    %v907 = vunpack.c.l.b16 %v204
    %v908 = vunpack.c.h.b16 %v204
    %v909 = vunpack.c.l.b16 %v205
    %v910 = vunpack.c.h.b16 %v205
    %v911 = vunpack.c.l.b16 %v206
    %v912 = vunpack.c.h.b16 %v206
    %v913 = vunpack.c.l.b16 %v207
    %v914 = vunpack.c.h.b16 %v207
    %v915 = vunpack.c.l.b16 %v208
    %v916 = vunpack.c.h.b16 %v208
    %v917 = vunpack.c.l.b16 %v209
    %v918 = vunpack.c.h.b16 %v209
    %v919 = vunpack.c.l.b16 %v210
    %v920 = vunpack.c.h.b16 %v210
    %v921 = vunpack.c.l.b16 %v211
    %v922 = vunpack.c.h.b16 %v211
    %v923 = vunpack.c.l.b16 %v212
    %v924 = vunpack.c.h.b16 %v212
    %v925 = vunpack.c.l.b16 %v213
    %v926 = vunpack.c.h.b16 %v213
    %v927 = vunpack.c.l.b16 %v214
    %v928 = vunpack.c.h.b16 %v214
    %v929 = vunpack.c.l.b16 %v215
    %v930 = vunpack.c.h.b16 %v215
    %v931 = vunpack.c.l.b16 %v216
    %v932 = vunpack.c.h.b16 %v216
    %v933 = vunpack.c.l.b16 %v217
    %v934 = vunpack.c.h.b16 %v217
    %v935 = vunpack.c.l.b16 %v218
    %v936 = vunpack.c.h.b16 %v218
    %v937 = vunpack.c.l.b16 %v219
    %v938 = vunpack.c.h.b16 %v219
    %v939 = vunpack.c.l.b16 %v220
    %v940 = vunpack.c.h.b16 %v220
    %v941 = vunpack.c.l.b16 %v221
    %v942 = vunpack.c.h.b16 %v221
    %v943 = vunpack.c.l.b16 %v222
    %v944 = vunpack.c.h.b16 %v222
    %v945 = vunpack.c.l.b16 %v223
    %v946 = vunpack.c.h.b16 %v223
    %v947 = vunpack.c.l.b16 %v224
    %v948 = vunpack.c.h.b16 %v224
    %v949 = vunpack.c.l.b16 %v225
    %v950 = vunpack.c.h.b16 %v225
    %v951 = vunpack.c.l.b16 %v226
    %v952 = vunpack.c.h.b16 %v226
    %v953 = vunpack.c.l.b16 %v227
    %v954 = vunpack.c.h.b16 %v227
    %v955 = vunpack.c.l.b16 %v228
    %v956 = vunpack.c.h.b16 %v228
    %v957 = vunpack.c.l.b16 %v229
    %v958 = vunpack.c.h.b16 %v229
    %v959 = vunpack.c.l.b16 %v230
    %v960 = vunpack.c.h.b16 %v230
    %v961 = vunpack.c.l.b16 %v231
    %v962 = vunpack.c.h.b16 %v231
    %v963 = vunpack.c.l.b16 %v232
    %v964 = vunpack.c.h.b16 %v232
    %v965 = vunpack.c.l.b16 %v233
    %v966 = vunpack.c.h.b16 %v233
    %v967 = vunpack.c.l.b16 %v234
    %v968 = vunpack.c.h.b16 %v234
    %v969 = vunpack.c.l.b16 %v235
    %v970 = vunpack.c.h.b16 %v235
    %v971 = vunpack.c.l.b16 %v236
    %v972 = vunpack.c.h.b16 %v236
    %v973 = vunpack.c.l.b16 %v237
    %v974 = vunpack.c.h.b16 %v237
    %v975 = vunpack.c.l.b16 %v238
    %v976 = vunpack.c.h.b16 %v238
    %v977 = vunpack.c.l.b16 %v239
    %v978 = vunpack.c.h.b16 %v239
    %v979 = vunpack.c.l.b16 %v240
    %v980 = vunpack.c.h.b16 %v240
    %v981 = vunpack.c.l.b16 %v241
    %v982 = vunpack.c.h.b16 %v241
    %v983 = vunpack.c.l.b16 %v242
    %v984 = vunpack.c.h.b16 %v242
    %v985 = vunpack.c.l.b16 %v243
    %v986 = vunpack.c.h.b16 %v243
    %v987 = vunpack.c.l.b16 %v244
    %v988 = vunpack.c.h.b16 %v244
    %v989 = vunpack.c.l.b16 %v245
    %v990 = vunpack.c.h.b16 %v245
    %v991 = vunpack.c.l.b16 %v246
    %v992 = vunpack.c.h.b16 %v246
    %v993 = vunpack.c.l.b16 %v247
    %v994 = vunpack.c.h.b16 %v247
    %v995 = vunpack.c.l.b16 %v248
    %v996 = vunpack.c.h.b16 %v248
    %v997 = vunpack.c.l.b16 %v249
    %v998 = vunpack.c.h.b16 %v249
    %v999 = vunpack.c.l.b16 %v250
    %v1000 = vunpack.c.h.b16 %v250
    %v1001 = vunpack.c.l.b16 %v251
    %v1002 = vunpack.c.h.b16 %v251
    %v1003 = vunpack.c.l.b16 %v252
    %v1004 = vunpack.c.h.b16 %v252
    %v1005 = vunpack.c.l.b16 %v253
    %v1006 = vunpack.c.h.b16 %v253
    %v1007 = vunpack.c.l.b16 %v254
    %v1008 = vunpack.c.h.b16 %v254
    %v1009 = vunpack.c.l.b16 %v255
    %v1010 = vunpack.c.h.b16 %v255
    %v1011 = vunpack.c.l.b16 %v256
    %v1012 = vunpack.c.h.b16 %v256
    %v1013 = vunpack.c.l.b16 %v257
    %v1014 = vunpack.c.h.b16 %v257
    %v1015 = vunpack.c.l.b16 %v258
    %v1016 = vunpack.c.h.b16 %v258
    %v1017 = vunpack.c.l.b16 %v259
    %v1018 = vunpack.c.h.b16 %v259
    %v1019 = vunpack.c.l.b16 %v260
    %v1020 = vunpack.c.h.b16 %v260
    %v1021 = vunpack.c.l.b16 %v261
    %v1022 = vunpack.c.h.b16 %v261
    %v1023 = vunpack.c.l.b16 %v262
    %v1024 = vunpack.c.h.b16 %v262
    %v1025 = vunpack.c.l.b16 %v263
    %v1026 = vunpack.c.h.b16 %v263
    %v1027 = vunpack.c.l.b16 %v264
    %v1028 = vunpack.c.h.b16 %v264
    %v1029 = vunpack.c.l.b16 %v265
    %v1030 = vunpack.c.h.b16 %v265
    %v1031 = vunpack.c.l.b16 %v266
    %v1032 = vunpack.c.h.b16 %v266
    %v1033 = vunpack.c.l.b16 %v267
    %v1034 = vunpack.c.h.b16 %v267
    %v1035 = vunpack.c.l.b16 %v268
    %v1036 = vunpack.c.h.b16 %v268
    %v1037 = vunpack.c.l.b16 %v269
    %v1038 = vunpack.c.h.b16 %v269
    %v1039 = vunpack.c.l.b16 %v270
    %v1040 = vunpack.c.h.b16 %v270
    %v1041 = vunpack.c.l.b16 %v271
    %v1042 = vunpack.c.h.b16 %v271
    %v1043 = vunpack.c.l.b16 %v272
    %v1044 = vunpack.c.h.b16 %v272
    %v1045 = vunpack.c.l.b16 %v273
    %v1046 = vunpack.c.h.b16 %v273
    %v1047 = vunpack.c.l.b16 %v274
    %v1048 = vunpack.c.h.b16 %v274
    %v1049 = vunpack.c.l.b16 %v275
    %v1050 = vunpack.c.h.b16 %v275
    %v1051 = vunpack.c.l.b16 %v276
    %v1052 = vunpack.c.h.b16 %v276
    %v1053 = vunpack.c.l.b16 %v277
    %v1054 = vunpack.c.h.b16 %v277
    %v1055 = vunpack.c.l.b16 %v278
    %v1056 = vunpack.c.h.b16 %v278
    %v1057 = vunpack.c.l.b16 %v279
    %v1058 = vunpack.c.h.b16 %v279
    %v1059 = vunpack.c.l.b16 %v280
    %v1060 = vunpack.c.h.b16 %v280
    %v1061 = vunpack.c.l.b16 %v281
    %v1062 = vunpack.c.h.b16 %v281
    %v1063 = vunpack.c.l.b16 %v282
    %v1064 = vunpack.c.h.b16 %v282
    %v1065 = vunpack.c.l.b16 %v283
    %v1066 = vunpack.c.h.b16 %v283
    %v1067 = vunpack.c.l.b16 %v284
    %v1068 = vunpack.c.h.b16 %v284
    %v1069 = vunpack.c.l.b16 %v285
    %v1070 = vunpack.c.h.b16 %v285
    %v1071 = vunpack.c.l.b16 %v286
    %v1072 = vunpack.c.h.b16 %v286
    %v1073 = vunpack.c.l.b16 %v287
    %v1074 = vunpack.c.h.b16 %v287
    %v1075 = vunpack.c.l.b16 %v288
    %v1076 = vunpack.c.h.b16 %v288
    %v1077 = vunpack.c.l.b16 %v289
    %v1078 = vunpack.c.h.b16 %v289
    %v1079 = vunpack.c.l.b16 %v290
    %v1080 = vunpack.c.h.b16 %v290
    %v1081 = vunpack.c.l.b16 %v291
    %v1082 = vunpack.c.h.b16 %v291
    %v1083 = vunpack.c.l.b16 %v292
    %v1084 = vunpack.c.h.b16 %v292
    %v1085 = vunpack.c.l.b16 %v293
    %v1086 = vunpack.c.h.b16 %v293
    %v1087 = vunpack.c.l.b16 %v294
    %v1088 = vunpack.c.h.b16 %v294
    %v1089 = vunpack.c.l.b16 %v295
    %v1090 = vunpack.c.h.b16 %v295
    %v1091 = vunpack.c.l.b16 %v296
    %v1092 = vunpack.c.h.b16 %v296
    %v1093 = vunpack.c.l.b16 %v297
    %v1094 = vunpack.c.h.b16 %v297
    %v1095 = vunpack.c.l.b16 %v298
    %v1096 = vunpack.c.h.b16 %v298
    %v1097 = vunpack.c.l.b16 %v299
    %v1098 = vunpack.c.h.b16 %v299
    %v1099 = vunpack.c.l.b16 %v300
    %v1100 = vunpack.c.h.b16 %v300
    %v1101 = vunpack.c.l.b16 %v301
    %v1102 = vunpack.c.h.b16 %v301
    %v1103 = vunpack.c.l.b16 %v302
    %v1104 = vunpack.c.h.b16 %v302
    %v1105 = vunpack.c.l.b16 %v303
    %v1106 = vunpack.c.h.b16 %v303
    %v1107 = vunpack.c.l.b16 %v304
    %v1108 = vunpack.c.h.b16 %v304
    %v1109 = vunpack.c.l.b16 %v305
    %v1110 = vunpack.c.h.b16 %v305
    %v1111 = vunpack.c.l.b16 %v306
    %v1112 = vunpack.c.h.b16 %v306
    %v1113 = vunpack.c.l.b16 %v307
    %v1114 = vunpack.c.h.b16 %v307
    %v1115 = vunpack.c.l.b16 %v308
    %v1116 = vunpack.c.h.b16 %v308
    %v1117 = vunpack.c.l.b16 %v309
    %v1118 = vunpack.c.h.b16 %v309
    %v1119 = vunpack.c.l.b16 %v310
    %v1120 = vunpack.c.h.b16 %v310
    %v1121 = vunpack.c.l.b16 %v311
    %v1122 = vunpack.c.h.b16 %v311
    %v1123 = vunpack.c.l.b16 %v312
    %v1124 = vunpack.c.h.b16 %v312
    %v1125 = vunpack.c.l.b16 %v313
    %v1126 = vunpack.c.h.b16 %v313
    %v1127 = vunpack.c.l.b16 %v314
    %v1128 = vunpack.c.h.b16 %v314
    %v1129 = vunpack.c.l.b16 %v315
    %v1130 = vunpack.c.h.b16 %v315
    %v1131 = vunpack.c.l.b16 %v316
    %v1132 = vunpack.c.h.b16 %v316
    %v1133 = vunpack.c.l.b16 %v317
    %v1134 = vunpack.c.h.b16 %v317
    %v1135 = vunpack.c.l.b16 %v318
    %v1136 = vunpack.c.h.b16 %v318
    %v1137 = vunpack.c.l.b16 %v319
    %v1138 = vunpack.c.h.b16 %v319
    %v1139 = vunpack.c.l.b16 %v320
    %v1140 = vunpack.c.h.b16 %v320
    %v1141 = vunpack.c.l.b16 %v321
    %v1142 = vunpack.c.h.b16 %v321
    %v1143 = vunpack.c.l.b16 %v322
    %v1144 = vunpack.c.h.b16 %v322
    %v1145 = vunpack.c.l.b16 %v323
    %v1146 = vunpack.c.h.b16 %v323
    %v1147 = vunpack.c.l.b16 %v324
    %v1148 = vunpack.c.h.b16 %v324
    %v1149 = vunpack.c.l.b16 %v325
    %v1150 = vunpack.c.h.b16 %v325
    %v1151 = vunpack.c.l.b16 %v326
    %v1152 = vunpack.c.h.b16 %v326
    %v1153 = vunpack.c.l.b16 %v327
    %v1154 = vunpack.c.h.b16 %v327
    %v1155 = vunpack.c.l.b16 %v328
    %v1156 = vunpack.c.h.b16 %v328
    %v1157 = vunpack.c.l.b16 %v329
    %v1158 = vunpack.c.h.b16 %v329
    %v1159 = vunpack.c.l.b16 %v330
    %v1160 = vunpack.c.h.b16 %v330
    %v1161 = vunpack.c.l.b16 %v331
    %v1162 = vunpack.c.h.b16 %v331
    %v1163 = vunpack.c.l.b16 %v332
    %v1164 = vunpack.c.h.b16 %v332
    %v1165 = vunpack.c.l.b16 %v333
    %v1166 = vunpack.c.h.b16 %v333
    %v1167 = vunpack.c.l.b16 %v334
    %v1168 = vunpack.c.h.b16 %v334
    %v1169 = vunpack.c.l.b16 %v335
    %v1170 = vunpack.c.h.b16 %v335
    %v1171 = vunpack.c.l.b16 %v336
    %v1172 = vunpack.c.h.b16 %v336
    %v1173 = vunpack.c.l.b16 %v337
    %v1174 = vunpack.c.h.b16 %v337
    %v1175 = vunpack.c.l.b16 %v338
    %v1176 = vunpack.c.h.b16 %v338
    %v1177 = vunpack.c.l.b16 %v339
    %v1178 = vunpack.c.h.b16 %v339
    %v1179 = vunpack.c.l.b16 %v340
    %v1180 = vunpack.c.h.b16 %v340
    %v1181 = vunpack.c.l.b16 %v341
    %v1182 = vunpack.c.h.b16 %v341
    %v1183 = vunpack.c.l.b16 %v342
    %v1184 = vunpack.c.h.b16 %v342
    %v1185 = vunpack.c.l.b16 %v343
    %v1186 = vunpack.c.h.b16 %v343
    %v1187 = vunpack.c.l.b16 %v344
    %v1188 = vunpack.c.h.b16 %v344
    %v1189 = vunpack.c.l.b16 %v345
    %v1190 = vunpack.c.h.b16 %v345
    %v1191 = vunpack.c.l.b16 %v346
    %v1192 = vunpack.c.h.b16 %v346
    %v1193 = vunpack.c.l.b16 %v347
    %v1194 = vunpack.c.h.b16 %v347
    %v1195 = vunpack.c.l.b16 %v348
    %v1196 = vunpack.c.h.b16 %v348
    %v1197 = vunpack.c.l.b16 %v349
    %v1198 = vunpack.c.h.b16 %v349
    %v1199 = vunpack.c.l.b16 %v350
    %v1200 = vunpack.c.h.b16 %v350
    %v1201 = vunpack.c.l.b16 %v351
    %v1202 = vunpack.c.h.b16 %v351
    %v1203 = vunpack.c.l.b16 %v352
    %v1204 = vunpack.c.h.b16 %v352
    %v1205 = vunpack.c.l.b16 %v353
    %v1206 = vunpack.c.h.b16 %v353
    %v1207 = vunpack.c.l.b16 %v354
    %v1208 = vunpack.c.h.b16 %v354
    %v1209 = vunpack.c.l.b16 %v355
    %v1210 = vunpack.c.h.b16 %v355
    %v1211 = vunpack.c.l.b16 %v356
    %v1212 = vunpack.c.h.b16 %v356
    %v1213 = vunpack.c.l.b16 %v357
    %v1214 = vunpack.c.h.b16 %v357
    %v1215 = vunpack.c.l.b16 %v358
    %v1216 = vunpack.c.h.b16 %v358
    %v1217 = vunpack.c.l.b16 %v359
    %v1218 = vunpack.c.h.b16 %v359
    %v1219 = vunpack.c.l.b16 %v360
    %v1220 = vunpack.c.h.b16 %v360
    %v1221 = vunpack.c.l.b16 %v361
    %v1222 = vunpack.c.h.b16 %v361
    %v1223 = vunpack.c.l.b16 %v362
    %v1224 = vunpack.c.h.b16 %v362
    %v1225 = vunpack.c.l.b16 %v363
    %v1226 = vunpack.c.h.b16 %v363
    %v1227 = vunpack.c.l.b16 %v364
    %v1228 = vunpack.c.h.b16 %v364
    %v1229 = vunpack.c.l.b16 %v365
    %v1230 = vunpack.c.h.b16 %v365
    %v1231 = vunpack.c.l.b16 %v366
    %v1232 = vunpack.c.h.b16 %v366
    %v1233 = vunpack.c.l.b16 %v367
    %v1234 = vunpack.c.h.b16 %v367
    %v1235 = vunpack.c.l.b16 %v368
    %v1236 = vunpack.c.h.b16 %v368
    %v1237 = vunpack.c.l.b16 %v369
    %v1238 = vunpack.c.h.b16 %v369
    %v1239 = vunpack.c.l.b16 %v370
    %v1240 = vunpack.c.h.b16 %v370
    %v1241 = vunpack.c.l.b16 %v371
    %v1242 = vunpack.c.h.b16 %v371
    %v1243 = vunpack.c.l.b16 %v372
    %v1244 = vunpack.c.h.b16 %v372
    %v1245 = vunpack.c.l.b16 %v373
    %v1246 = vunpack.c.h.b16 %v373
    %v1247 = vunpack.c.l.b16 %v374
    %v1248 = vunpack.c.h.b16 %v374
    %v1249 = vunpack.c.l.b16 %v375
    %v1250 = vunpack.c.h.b16 %v375
    %v1251 = vunpack.c.l.b16 %v376
    %v1252 = vunpack.c.h.b16 %v376
    %v1253 = vunpack.c.l.b16 %v377
    %v1254 = vunpack.c.h.b16 %v377
    %v1255 = vunpack.c.l.b16 %v378
    %v1256 = vunpack.c.h.b16 %v378
    %v1257 = vpack.c.b16 %v687, %v681
    %v1258 = vpack.c.b16 %v688, %v682
    %v1259 = vpack.c.b16 %v689, %v683
    %v1260 = vpack.c.b16 %v690, %v684
    %v1261 = vpack.c.b16 %v691, %v685
    %v1262 = vpack.c.b16 %v692, %v686
    %v1263 = vpack.c.b16 %v699, %v693
    %v1264 = vpack.c.b16 %v700, %v694
    %v1265 = vpack.c.b16 %v701, %v695
    %v1266 = vpack.c.b16 %v702, %v696
    %v1267 = vpack.c.b16 %v703, %v697
    %v1268 = vpack.c.b16 %v704, %v698
    %v1269 = vpack.c.b16 %v711, %v705
    %v1270 = vpack.c.b16 %v712, %v706
    %v1271 = vpack.c.b16 %v713, %v707
    %v1272 = vpack.c.b16 %v714, %v708
    %v1273 = vpack.c.b16 %v715, %v709
    %v1274 = vpack.c.b16 %v716, %v710
    %v1275 = vpack.c.b16 %v723, %v717
    %v1276 = vpack.c.b16 %v724, %v718
    %v1277 = vpack.c.b16 %v725, %v719
    %v1278 = vpack.c.b16 %v726, %v720
    %v1279 = vpack.c.b16 %v727, %v721
    %v1280 = vpack.c.b16 %v728, %v722
    %v1281 = vpack.c.b16 %v735, %v729
    %v1282 = vpack.c.b16 %v736, %v730
    %v1283 = vpack.c.b16 %v737, %v731
    %v1284 = vpack.c.b16 %v738, %v732
    %v1285 = vpack.c.b16 %v739, %v733
    %v1286 = vpack.c.b16 %v740, %v734
    %v1287 = vpack.c.b16 %v747, %v741
    %v1288 = vpack.c.b16 %v748, %v742
    %v1289 = vpack.c.b16 %v749, %v743
    %v1290 = vpack.c.b16 %v750, %v744
    %v1291 = vpack.c.b16 %v751, %v745
    %v1292 = vpack.c.b16 %v752, %v746
    %v1293 = vpack.c.b16 %v759, %v753
    %v1294 = vpack.c.b16 %v760, %v754
    %v1295 = vpack.c.b16 %v761, %v755
    %v1296 = vpack.c.b16 %v762, %v756
    %v1297 = vpack.c.b16 %v763, %v757
    %v1298 = vpack.c.b16 %v764, %v758
    %v1299 = vpack.c.b16 %v771, %v765
    %v1300 = vpack.c.b16 %v772, %v766
    %v1301 = vpack.c.b16 %v773, %v767
    %v1302 = vpack.c.b16 %v774, %v768
    %v1303 = vpack.c.b16 %v775, %v769
    %v1304 = vpack.c.b16 %v776, %v770
    %v1305 = vpack.c.b16 %v783, %v777
    %v1306 = vpack.c.b16 %v784, %v778
    %v1307 = vpack.c.b16 %v785, %v779
    %v1308 = vpack.c.b16 %v786, %v780
    %v1309 = vpack.c.b16 %v787, %v781
    %v1310 = vpack.c.b16 %v788, %v782
    %v1311 = vpack.c.b16 %v795, %v789
    %v1312 = vpack.c.b16 %v796, %v790
    %v1313 = vpack.c.b16 %v797, %v791
    %v1314 = vpack.c.b16 %v798, %v792
    %v1315 = vpack.c.b16 %v799, %v793
    %v1316 = vpack.c.b16 %v800, %v794
    %v1317 = vpack.c.b16 %v807, %v801
    %v1318 = vpack.c.b16 %v808, %v802
    %v1319 = vpack.c.b16 %v809, %v803
    %v1320 = vpack.c.b16 %v810, %v804
    %v1321 = vpack.c.b16 %v811, %v805
    %v1322 = vpack.c.b16 %v812, %v806
    %v1323 = vpack.c.b16 %v819, %v813
    %v1324 = vpack.c.b16 %v820, %v814
    %v1325 = vpack.c.b16 %v821, %v815
    %v1326 = vpack.c.b16 %v822, %v816
    %v1327 = vpack.c.b16 %v823, %v817
    %v1328 = vpack.c.b16 %v824, %v818
    %v1329 = vpack.c.b16 %v831, %v825
    %v1330 = vpack.c.b16 %v832, %v826
    %v1331 = vpack.c.b16 %v833, %v827
    %v1332 = vpack.c.b16 %v834, %v828
    %v1333 = vpack.c.b16 %v835, %v829
    %v1334 = vpack.c.b16 %v836, %v830
    %v1335 = vpack.c.b16 %v843, %v837
    %v1336 = vpack.c.b16 %v844, %v838
    %v1337 = vpack.c.b16 %v845, %v839
    %v1338 = vpack.c.b16 %v846, %v840
    %v1339 = vpack.c.b16 %v847, %v841
    %v1340 = vpack.c.b16 %v848, %v842
    %v1341 = vpack.c.b16 %v855, %v849
    %v1342 = vpack.c.b16 %v856, %v850
    %v1343 = vpack.c.b16 %v857, %v851
    %v1344 = vpack.c.b16 %v858, %v852
    %v1345 = vpack.c.b16 %v859, %v853
    %v1346 = vpack.c.b16 %v860, %v854
    %v1347 = vpack.c.b16 %v867, %v861
    %v1348 = vpack.c.b16 %v868, %v862
    %v1349 = vpack.c.b16 %v869, %v863
    %v1350 = vpack.c.b16 %v870, %v864
    %v1351 = vpack.c.b16 %v871, %v865
    %v1352 = vpack.c.b16 %v872, %v866
    %v1353 = vpack.c.b16 %v879, %v873
    %v1354 = vpack.c.b16 %v880, %v874
    %v1355 = vpack.c.b16 %v881, %v875
    %v1356 = vpack.c.b16 %v882, %v876
    %v1357 = vpack.c.b16 %v883, %v877
    %v1358 = vpack.c.b16 %v884, %v878
    %v1359 = vpack.c.b16 %v891, %v885
    %v1360 = vpack.c.b16 %v892, %v886
    %v1361 = vpack.c.b16 %v893, %v887
    %v1362 = vpack.c.b16 %v894, %v888
    %v1363 = vpack.c.b16 %v895, %v889
    %v1364 = vpack.c.b16 %v896, %v890
    %v1365 = vpack.c.b16 %v903, %v897
    %v1366 = vpack.c.b16 %v904, %v898
    %v1367 = vpack.c.b16 %v905, %v899
    %v1368 = vpack.c.b16 %v906, %v900
    %v1369 = vpack.c.b16 %v907, %v901
    %v1370 = vpack.c.b16 %v908, %v902
    %v1371 = vpack.c.b16 %v915, %v909
    %v1372 = vpack.c.b16 %v916, %v910
    %v1373 = vpack.c.b16 %v917, %v911
    %v1374 = vpack.c.b16 %v918, %v912
    %v1375 = vpack.c.b16 %v919, %v913
    %v1376 = vpack.c.b16 %v920, %v914
    %v1377 = vpack.c.b16 %v927, %v921
    %v1378 = vpack.c.b16 %v928, %v922
    %v1379 = vpack.c.b16 %v929, %v923
    %v1380 = vpack.c.b16 %v930, %v924
    %v1381 = vpack.c.b16 %v931, %v925
    %v1382 = vpack.c.b16 %v932, %v926
    %v1383 = vpack.c.b16 %v939, %v933
    %v1384 = vpack.c.b16 %v940, %v934
    %v1385 = vpack.c.b16 %v941, %v935
    %v1386 = vpack.c.b16 %v942, %v936
    %v1387 = vpack.c.b16 %v943, %v937
    %v1388 = vpack.c.b16 %v944, %v938
    %v1389 = vpack.c.b16 %v951, %v945
    %v1390 = vpack.c.b16 %v952, %v946
    %v1391 = vpack.c.b16 %v953, %v947
    %v1392 = vpack.c.b16 %v954, %v948
    %v1393 = vpack.c.b16 %v955, %v949
    %v1394 = vpack.c.b16 %v956, %v950
    %v1395 = vpack.c.b16 %v963, %v957
    %v1396 = vpack.c.b16 %v964, %v958
    %v1397 = vpack.c.b16 %v965, %v959
    %v1398 = vpack.c.b16 %v966, %v960
    %v1399 = vpack.c.b16 %v967, %v961
    %v1400 = vpack.c.b16 %v968, %v962
    %v1401 = vpack.c.b16 %v975, %v969
    %v1402 = vpack.c.b16 %v976, %v970
    %v1403 = vpack.c.b16 %v977, %v971
    %v1404 = vpack.c.b16 %v978, %v972
    %v1405 = vpack.c.b16 %v979, %v973
    %v1406 = vpack.c.b16 %v980, %v974
    %v1407 = vpack.c.b16 %v987, %v981
    %v1408 = vpack.c.b16 %v988, %v982
    %v1409 = vpack.c.b16 %v989, %v983
    %v1410 = vpack.c.b16 %v990, %v984
    %v1411 = vpack.c.b16 %v991, %v985
    %v1412 = vpack.c.b16 %v992, %v986
    %v1413 = vpack.c.b16 %v999, %v993
    %v1414 = vpack.c.b16 %v1000, %v994
    %v1415 = vpack.c.b16 %v1001, %v995
    %v1416 = vpack.c.b16 %v1002, %v996
    %v1417 = vpack.c.b16 %v1003, %v997
    %v1418 = vpack.c.b16 %v1004, %v998
    %v1419 = vpack.c.b16 %v1011, %v1005
    %v1420 = vpack.c.b16 %v1012, %v1006
    %v1421 = vpack.c.b16 %v1013, %v1007
    %v1422 = vpack.c.b16 %v1014, %v1008
    %v1423 = vpack.c.b16 %v1015, %v1009
    %v1424 = vpack.c.b16 %v1016, %v1010
    %v1425 = vpack.c.b16 %v1023, %v1017
    %v1426 = vpack.c.b16 %v1024, %v1018
    %v1427 = vpack.c.b16 %v1025, %v1019
    %v1428 = vpack.c.b16 %v1026, %v1020
    %v1429 = vpack.c.b16 %v1027, %v1021
    %v1430 = vpack.c.b16 %v1028, %v1022
    %v1431 = vpack.c.b16 %v1035, %v1029
    %v1432 = vpack.c.b16 %v1036, %v1030
    %v1433 = vpack.c.b16 %v1037, %v1031
    %v1434 = vpack.c.b16 %v1038, %v1032
    %v1435 = vpack.c.b16 %v1039, %v1033
    %v1436 = vpack.c.b16 %v1040, %v1034
    %v1437 = vpack.c.b16 %v1047, %v1041
    %v1438 = vpack.c.b16 %v1048, %v1042
    %v1439 = vpack.c.b16 %v1049, %v1043
    %v1440 = vpack.c.b16 %v1050, %v1044
    %v1441 = vpack.c.b16 %v1051, %v1045
    %v1442 = vpack.c.b16 %v1052, %v1046
    %v1443 = vpack.c.b16 %v1059, %v1053
    %v1444 = vpack.c.b16 %v1060, %v1054
    %v1445 = vpack.c.b16 %v1061, %v1055
    %v1446 = vpack.c.b16 %v1062, %v1056
    %v1447 = vpack.c.b16 %v1063, %v1057
    %v1448 = vpack.c.b16 %v1064, %v1058
    %v1449 = vpack.c.b16 %v1071, %v1065
    %v1450 = vpack.c.b16 %v1072, %v1066
    %v1451 = vpack.c.b16 %v1073, %v1067
    %v1452 = vpack.c.b16 %v1074, %v1068
    %v1453 = vpack.c.b16 %v1075, %v1069
    %v1454 = vpack.c.b16 %v1076, %v1070
    %v1455 = vpack.c.b16 %v1083, %v1077
    %v1456 = vpack.c.b16 %v1084, %v1078
    %v1457 = vpack.c.b16 %v1085, %v1079
    %v1458 = vpack.c.b16 %v1086, %v1080
    %v1459 = vpack.c.b16 %v1087, %v1081
    %v1460 = vpack.c.b16 %v1088, %v1082
    %v1461 = vpack.c.b16 %v1095, %v1089
    %v1462 = vpack.c.b16 %v1096, %v1090
    %v1463 = vpack.c.b16 %v1097, %v1091
    %v1464 = vpack.c.b16 %v1098, %v1092
    %v1465 = vpack.c.b16 %v1099, %v1093
    %v1466 = vpack.c.b16 %v1100, %v1094
    %v1467 = vpack.c.b16 %v1107, %v1101
    %v1468 = vpack.c.b16 %v1108, %v1102
    %v1469 = vpack.c.b16 %v1109, %v1103
    %v1470 = vpack.c.b16 %v1110, %v1104
    %v1471 = vpack.c.b16 %v1111, %v1105
    %v1472 = vpack.c.b16 %v1112, %v1106
    %v1473 = vpack.c.b16 %v1119, %v1113
    %v1474 = vpack.c.b16 %v1120, %v1114
    %v1475 = vpack.c.b16 %v1121, %v1115
    %v1476 = vpack.c.b16 %v1122, %v1116
    %v1477 = vpack.c.b16 %v1123, %v1117
    %v1478 = vpack.c.b16 %v1124, %v1118
    %v1479 = vpack.c.b16 %v1131, %v1125
    %v1480 = vpack.c.b16 %v1132, %v1126
    %v1481 = vpack.c.b16 %v1133, %v1127
    %v1482 = vpack.c.b16 %v1134, %v1128
    %v1483 = vpack.c.b16 %v1135, %v1129
    %v1484 = vpack.c.b16 %v1136, %v1130
    %v1485 = vpack.c.b16 %v1143, %v1137
    %v1486 = vpack.c.b16 %v1144, %v1138
    %v1487 = vpack.c.b16 %v1145, %v1139
    %v1488 = vpack.c.b16 %v1146, %v1140
    %v1489 = vpack.c.b16 %v1147, %v1141
    %v1490 = vpack.c.b16 %v1148, %v1142
    %v1491 = vpack.c.b16 %v1155, %v1149
    %v1492 = vpack.c.b16 %v1156, %v1150
    %v1493 = vpack.c.b16 %v1157, %v1151
    %v1494 = vpack.c.b16 %v1158, %v1152
    %v1495 = vpack.c.b16 %v1159, %v1153
    %v1496 = vpack.c.b16 %v1160, %v1154
    %v1497 = vpack.c.b16 %v1167, %v1161
    %v1498 = vpack.c.b16 %v1168, %v1162
    %v1499 = vpack.c.b16 %v1169, %v1163
    %v1500 = vpack.c.b16 %v1170, %v1164
    %v1501 = vpack.c.b16 %v1171, %v1165
    %v1502 = vpack.c.b16 %v1172, %v1166
    %v1503 = vpack.c.b16 %v1179, %v1173
    %v1504 = vpack.c.b16 %v1180, %v1174
    %v1505 = vpack.c.b16 %v1181, %v1175
    %v1506 = vpack.c.b16 %v1182, %v1176
    %v1507 = vpack.c.b16 %v1183, %v1177
    %v1508 = vpack.c.b16 %v1184, %v1178
    %v1509 = vpack.c.b16 %v1191, %v1185
    %v1510 = vpack.c.b16 %v1192, %v1186
    %v1511 = vpack.c.b16 %v1193, %v1187
    %v1512 = vpack.c.b16 %v1194, %v1188
    %v1513 = vpack.c.b16 %v1195, %v1189
    %v1514 = vpack.c.b16 %v1196, %v1190
    %v1515 = vpack.c.b16 %v1203, %v1197
    %v1516 = vpack.c.b16 %v1204, %v1198
    %v1517 = vpack.c.b16 %v1205, %v1199
    %v1518 = vpack.c.b16 %v1206, %v1200
    %v1519 = vpack.c.b16 %v1207, %v1201
    %v1520 = vpack.c.b16 %v1208, %v1202
    %v1521 = vpack.c.b16 %v1215, %v1209
    %v1522 = vpack.c.b16 %v1216, %v1210
    %v1523 = vpack.c.b16 %v1217, %v1211
    %v1524 = vpack.c.b16 %v1218, %v1212
    %v1525 = vpack.c.b16 %v1219, %v1213
    %v1526 = vpack.c.b16 %v1220, %v1214
    %v1527 = vpack.c.b16 %v1227, %v1221
    %v1528 = vpack.c.b16 %v1228, %v1222
    %v1529 = vpack.c.b16 %v1229, %v1223
    %v1530 = vpack.c.b16 %v1230, %v1224
    %v1531 = vpack.c.b16 %v1231, %v1225
    %v1532 = vpack.c.b16 %v1232, %v1226
    %v1533 = vpack.c.b16 %v1239, %v1233
    %v1534 = vpack.c.b16 %v1240, %v1234
    %v1535 = vpack.c.b16 %v1241, %v1235
    %v1536 = vpack.c.b16 %v1242, %v1236
    %v1537 = vpack.c.b16 %v1243, %v1237
    %v1538 = vpack.c.b16 %v1244, %v1238
    %v1539 = vpack.c.b16 %v1251, %v1245
    %v1540 = vpack.c.b16 %v1252, %v1246
    %v1541 = vpack.c.b16 %v1253, %v1247
    %v1542 = vpack.c.b16 %v1254, %v1248
    %v1543 = vpack.c.b16 %v1255, %v1249
    %v1544 = vpack.c.b16 %v1256, %v1250
    %1833 = vmatpush.bf16.msra.mxu0 %v1299
    %1834 = vmatpush.bf16.msra.mxu0 %v1293
    %1835 = vmatpush.bf16.msra.mxu0 %v1287
    %1836 = vmatpush.bf16.msra.mxu0 %v1281
    %1837 = vmatpush.bf16.msra.mxu0 %v1275
    %1838 = vmatpush.bf16.msra.mxu0 %v1269
    %1839 = vmatpush.bf16.msra.mxu0 %v1263
    %1840 = vmatpush.bf16.msra.mxu0 %v1257
    %1841 = vmatmul.bf16.gmra.mxu0 %v85
    %v1842 = vpop.f32.mrf.mxu0
    %v1843 = vadd.f32 %v381, %v1842
    %v1844 = vpop.f32.mrf.mxu0
    %1845 = vdwg.mxu0
    %1846 = vmatpush.bf16.msra.mxu0 %v1347
    %1847 = vmatpush.bf16.msra.mxu0 %v1341
    %1848 = vmatpush.bf16.msra.mxu0 %v1335
    %1849 = vmatpush.bf16.msra.mxu0 %v1329
    %1850 = vmatpush.bf16.msra.mxu0 %v1323
    %1851 = vmatpush.bf16.msra.mxu0 %v1317
    %1852 = vmatpush.bf16.msra.mxu0 %v1311
    %1853 = vmatpush.bf16.msra.mxu0 %v1305
    %1854 = vmatmul.bf16.gmra.mxu0 %v86
    %v1855 = vpop.f32.mrf.mxu0
    %v1856 = vadd.f32 %v1843, %v1855
    %v1857 = vpop.f32.mrf.mxu0
    %1858 = vdwg.mxu0
    %1859 = vmatpush.bf16.msra.mxu0 %v1395
    %1860 = vmatpush.bf16.msra.mxu0 %v1389
    %1861 = vmatpush.bf16.msra.mxu0 %v1383
    %1862 = vmatpush.bf16.msra.mxu0 %v1377
    %1863 = vmatpush.bf16.msra.mxu0 %v1371
    %1864 = vmatpush.bf16.msra.mxu0 %v1365
    %1865 = vmatpush.bf16.msra.mxu0 %v1359
    %1866 = vmatpush.bf16.msra.mxu0 %v1353
    %1867 = vmatmul.bf16.gmra.mxu0 %v87
    %v1868 = vpop.f32.mrf.mxu0
    %v1869 = vadd.f32 %v1856, %v1868
    %v1870 = vpop.f32.mrf.mxu0
    %1871 = vdwg.mxu0
    %1872 = vmatpush.bf16.msra.mxu0 %v1443
    %1873 = vmatpush.bf16.msra.mxu0 %v1437
    %1874 = vmatpush.bf16.msra.mxu0 %v1431
    %1875 = vmatpush.bf16.msra.mxu0 %v1425
    %1876 = vmatpush.bf16.msra.mxu0 %v1419
    %1877 = vmatpush.bf16.msra.mxu0 %v1413
    %1878 = vmatpush.bf16.msra.mxu0 %v1407
    %1879 = vmatpush.bf16.msra.mxu0 %v1401
    %1880 = vmatmul.bf16.gmra.mxu0 %v88
    %v1881 = vpop.f32.mrf.mxu0
    %v1882 = vadd.f32 %v1869, %v1881
    %v1883 = vpop.f32.mrf.mxu0
    %1884 = vdwg.mxu0
    %1885 = vmatpush.bf16.msra.mxu0 %v1491
    %1886 = vmatpush.bf16.msra.mxu0 %v1485
    %1887 = vmatpush.bf16.msra.mxu0 %v1479
    %1888 = vmatpush.bf16.msra.mxu0 %v1473
    %1889 = vmatpush.bf16.msra.mxu0 %v1467
    %1890 = vmatpush.bf16.msra.mxu0 %v1461
    %1891 = vmatpush.bf16.msra.mxu0 %v1455
    %1892 = vmatpush.bf16.msra.mxu0 %v1449
    %1893 = vmatmul.bf16.gmra.mxu0 %v89
    %v1894 = vpop.f32.mrf.mxu0
    %v1895 = vadd.f32 %v1882, %v1894
    %v1896 = vpop.f32.mrf.mxu0
    %1897 = vdwg.mxu0
    %1898 = vmatpush.bf16.msra.mxu0 %v1539
    %1899 = vmatpush.bf16.msra.mxu0 %v1533
    %1900 = vmatpush.bf16.msra.mxu0 %v1527
    %1901 = vmatpush.bf16.msra.mxu0 %v1521
    %1902 = vmatpush.bf16.msra.mxu0 %v1515
    %1903 = vmatpush.bf16.msra.mxu0 %v1509
    %1904 = vmatpush.bf16.msra.mxu0 %v1503
    %1905 = vmatpush.bf16.msra.mxu0 %v1497
    %1906 = vmatmul.bf16.gmra.mxu0 %v90
    %v1907 = vpop.f32.mrf.mxu0
    %v1908 = vadd.f32 %v1895, %v1907
    %v1909 = vpop.f32.mrf.mxu0
    %1910 = vdwg.mxu0
    %1911 = vmatpush.bf16.msra.mxu0 %v1300
    %1912 = vmatpush.bf16.msra.mxu0 %v1294
    %1913 = vmatpush.bf16.msra.mxu0 %v1288
    %1914 = vmatpush.bf16.msra.mxu0 %v1282
    %1915 = vmatpush.bf16.msra.mxu0 %v1276
    %1916 = vmatpush.bf16.msra.mxu0 %v1270
    %1917 = vmatpush.bf16.msra.mxu0 %v1264
    %1918 = vmatpush.bf16.msra.mxu0 %v1258
    %1919 = vmatmul.bf16.gmra.mxu0 %v85
    %v1920 = vpop.f32.mrf.mxu0
    %v1921 = vadd.f32 %v382, %v1920
    %v1922 = vpop.f32.mrf.mxu0
    %1923 = vdwg.mxu0
    %1924 = vmatpush.bf16.msra.mxu0 %v1348
    %1925 = vmatpush.bf16.msra.mxu0 %v1342
    %1926 = vmatpush.bf16.msra.mxu0 %v1336
    %1927 = vmatpush.bf16.msra.mxu0 %v1330
    %1928 = vmatpush.bf16.msra.mxu0 %v1324
    %1929 = vmatpush.bf16.msra.mxu0 %v1318
    %1930 = vmatpush.bf16.msra.mxu0 %v1312
    %1931 = vmatpush.bf16.msra.mxu0 %v1306
    %1932 = vmatmul.bf16.gmra.mxu0 %v86
    %v1933 = vpop.f32.mrf.mxu0
    %v1934 = vadd.f32 %v1921, %v1933
    %v1935 = vpop.f32.mrf.mxu0
    %1936 = vdwg.mxu0
    %1937 = vmatpush.bf16.msra.mxu0 %v1396
    %1938 = vmatpush.bf16.msra.mxu0 %v1390
    %1939 = vmatpush.bf16.msra.mxu0 %v1384
    %1940 = vmatpush.bf16.msra.mxu0 %v1378
    %1941 = vmatpush.bf16.msra.mxu0 %v1372
    %1942 = vmatpush.bf16.msra.mxu0 %v1366
    %1943 = vmatpush.bf16.msra.mxu0 %v1360
    %1944 = vmatpush.bf16.msra.mxu0 %v1354
    %1945 = vmatmul.bf16.gmra.mxu0 %v87
    %v1946 = vpop.f32.mrf.mxu0
    %v1947 = vadd.f32 %v1934, %v1946
    %v1948 = vpop.f32.mrf.mxu0
    %1949 = vdwg.mxu0
    %1950 = vmatpush.bf16.msra.mxu0 %v1444
    %1951 = vmatpush.bf16.msra.mxu0 %v1438
    %1952 = vmatpush.bf16.msra.mxu0 %v1432
    %1953 = vmatpush.bf16.msra.mxu0 %v1426
    %1954 = vmatpush.bf16.msra.mxu0 %v1420
    %1955 = vmatpush.bf16.msra.mxu0 %v1414
    %1956 = vmatpush.bf16.msra.mxu0 %v1408
    %1957 = vmatpush.bf16.msra.mxu0 %v1402
    %1958 = vmatmul.bf16.gmra.mxu0 %v88
    %v1959 = vpop.f32.mrf.mxu0
    %v1960 = vadd.f32 %v1947, %v1959
    %v1961 = vpop.f32.mrf.mxu0
    %1962 = vdwg.mxu0
    %1963 = vmatpush.bf16.msra.mxu0 %v1492
    %1964 = vmatpush.bf16.msra.mxu0 %v1486
    %1965 = vmatpush.bf16.msra.mxu0 %v1480
    %1966 = vmatpush.bf16.msra.mxu0 %v1474
    %1967 = vmatpush.bf16.msra.mxu0 %v1468
    %1968 = vmatpush.bf16.msra.mxu0 %v1462
    %1969 = vmatpush.bf16.msra.mxu0 %v1456
    %1970 = vmatpush.bf16.msra.mxu0 %v1450
    %1971 = vmatmul.bf16.gmra.mxu0 %v89
    %v1972 = vpop.f32.mrf.mxu0
    %v1973 = vadd.f32 %v1960, %v1972
    %v1974 = vpop.f32.mrf.mxu0
    %1975 = vdwg.mxu0
    %1976 = vmatpush.bf16.msra.mxu0 %v1540
    %1977 = vmatpush.bf16.msra.mxu0 %v1534
    %1978 = vmatpush.bf16.msra.mxu0 %v1528
    %1979 = vmatpush.bf16.msra.mxu0 %v1522
    %1980 = vmatpush.bf16.msra.mxu0 %v1516
    %1981 = vmatpush.bf16.msra.mxu0 %v1510
    %1982 = vmatpush.bf16.msra.mxu0 %v1504
    %1983 = vmatpush.bf16.msra.mxu0 %v1498
    %1984 = vmatmul.bf16.gmra.mxu0 %v90
    %v1985 = vpop.f32.mrf.mxu0
    %v1986 = vadd.f32 %v1973, %v1985
    %v1987 = vpop.f32.mrf.mxu0
    %1988 = vdwg.mxu0
    %1989 = vmatpush.bf16.msra.mxu0 %v1301
    %1990 = vmatpush.bf16.msra.mxu0 %v1295
    %1991 = vmatpush.bf16.msra.mxu0 %v1289
    %1992 = vmatpush.bf16.msra.mxu0 %v1283
    %1993 = vmatpush.bf16.msra.mxu0 %v1277
    %1994 = vmatpush.bf16.msra.mxu0 %v1271
    %1995 = vmatpush.bf16.msra.mxu0 %v1265
    %1996 = vmatpush.bf16.msra.mxu0 %v1259
    %1997 = vmatmul.bf16.gmra.mxu0 %v85
    %v1998 = vpop.f32.mrf.mxu0
    %v1999 = vadd.f32 %v383, %v1998
    %v2000 = vpop.f32.mrf.mxu0
    %2001 = vdwg.mxu0
    %2002 = vmatpush.bf16.msra.mxu0 %v1349
    %2003 = vmatpush.bf16.msra.mxu0 %v1343
    %2004 = vmatpush.bf16.msra.mxu0 %v1337
    %2005 = vmatpush.bf16.msra.mxu0 %v1331
    %2006 = vmatpush.bf16.msra.mxu0 %v1325
    %2007 = vmatpush.bf16.msra.mxu0 %v1319
    %2008 = vmatpush.bf16.msra.mxu0 %v1313
    %2009 = vmatpush.bf16.msra.mxu0 %v1307
    %2010 = vmatmul.bf16.gmra.mxu0 %v86
    %v2011 = vpop.f32.mrf.mxu0
    %v2012 = vadd.f32 %v1999, %v2011
    %v2013 = vpop.f32.mrf.mxu0
    %2014 = vdwg.mxu0
    %2015 = vmatpush.bf16.msra.mxu0 %v1397
    %2016 = vmatpush.bf16.msra.mxu0 %v1391
    %2017 = vmatpush.bf16.msra.mxu0 %v1385
    %2018 = vmatpush.bf16.msra.mxu0 %v1379
    %2019 = vmatpush.bf16.msra.mxu0 %v1373
    %2020 = vmatpush.bf16.msra.mxu0 %v1367
    %2021 = vmatpush.bf16.msra.mxu0 %v1361
    %2022 = vmatpush.bf16.msra.mxu0 %v1355
    %2023 = vmatmul.bf16.gmra.mxu0 %v87
    %v2024 = vpop.f32.mrf.mxu0
    %v2025 = vadd.f32 %v2012, %v2024
    %v2026 = vpop.f32.mrf.mxu0
    %2027 = vdwg.mxu0
    %2028 = vmatpush.bf16.msra.mxu0 %v1445
    %2029 = vmatpush.bf16.msra.mxu0 %v1439
    %2030 = vmatpush.bf16.msra.mxu0 %v1433
    %2031 = vmatpush.bf16.msra.mxu0 %v1427
    %2032 = vmatpush.bf16.msra.mxu0 %v1421
    %2033 = vmatpush.bf16.msra.mxu0 %v1415
    %2034 = vmatpush.bf16.msra.mxu0 %v1409
    %2035 = vmatpush.bf16.msra.mxu0 %v1403
    %2036 = vmatmul.bf16.gmra.mxu0 %v88
    %v2037 = vpop.f32.mrf.mxu0
    %v2038 = vadd.f32 %v2025, %v2037
    %v2039 = vpop.f32.mrf.mxu0
    %2040 = vdwg.mxu0
    %2041 = vmatpush.bf16.msra.mxu0 %v1493
    %2042 = vmatpush.bf16.msra.mxu0 %v1487
    %2043 = vmatpush.bf16.msra.mxu0 %v1481
    %2044 = vmatpush.bf16.msra.mxu0 %v1475
    %2045 = vmatpush.bf16.msra.mxu0 %v1469
    %2046 = vmatpush.bf16.msra.mxu0 %v1463
    %2047 = vmatpush.bf16.msra.mxu0 %v1457
    %2048 = vmatpush.bf16.msra.mxu0 %v1451
    %2049 = vmatmul.bf16.gmra.mxu0 %v89
    %v2050 = vpop.f32.mrf.mxu0
    %v2051 = vadd.f32 %v2038, %v2050
    %v2052 = vpop.f32.mrf.mxu0
    %2053 = vdwg.mxu0
    %2054 = vmatpush.bf16.msra.mxu0 %v1541
    %2055 = vmatpush.bf16.msra.mxu0 %v1535
    %2056 = vmatpush.bf16.msra.mxu0 %v1529
    %2057 = vmatpush.bf16.msra.mxu0 %v1523
    %2058 = vmatpush.bf16.msra.mxu0 %v1517
    %2059 = vmatpush.bf16.msra.mxu0 %v1511
    %2060 = vmatpush.bf16.msra.mxu0 %v1505
    %2061 = vmatpush.bf16.msra.mxu0 %v1499
    %2062 = vmatmul.bf16.gmra.mxu0 %v90
    %v2063 = vpop.f32.mrf.mxu0
    %v2064 = vadd.f32 %v2051, %v2063
    %v2065 = vpop.f32.mrf.mxu0
    %2066 = vdwg.mxu0
    %2067 = vmatpush.bf16.msra.mxu0 %v1302
    %2068 = vmatpush.bf16.msra.mxu0 %v1296
    %2069 = vmatpush.bf16.msra.mxu0 %v1290
    %2070 = vmatpush.bf16.msra.mxu0 %v1284
    %2071 = vmatpush.bf16.msra.mxu0 %v1278
    %2072 = vmatpush.bf16.msra.mxu0 %v1272
    %2073 = vmatpush.bf16.msra.mxu0 %v1266
    %2074 = vmatpush.bf16.msra.mxu0 %v1260
    %2075 = vmatmul.bf16.gmra.mxu0 %v85
    %v2076 = vpop.f32.mrf.mxu0
    %v2077 = vadd.f32 %v384, %v2076
    %v2078 = vpop.f32.mrf.mxu0
    %2079 = vdwg.mxu0
    %2080 = vmatpush.bf16.msra.mxu0 %v1350
    %2081 = vmatpush.bf16.msra.mxu0 %v1344
    %2082 = vmatpush.bf16.msra.mxu0 %v1338
    %2083 = vmatpush.bf16.msra.mxu0 %v1332
    %2084 = vmatpush.bf16.msra.mxu0 %v1326
    %2085 = vmatpush.bf16.msra.mxu0 %v1320
    %2086 = vmatpush.bf16.msra.mxu0 %v1314
    %2087 = vmatpush.bf16.msra.mxu0 %v1308
    %2088 = vmatmul.bf16.gmra.mxu0 %v86
    %v2089 = vpop.f32.mrf.mxu0
    %v2090 = vadd.f32 %v2077, %v2089
    %v2091 = vpop.f32.mrf.mxu0
    %2092 = vdwg.mxu0
    %2093 = vmatpush.bf16.msra.mxu0 %v1398
    %2094 = vmatpush.bf16.msra.mxu0 %v1392
    %2095 = vmatpush.bf16.msra.mxu0 %v1386
    %2096 = vmatpush.bf16.msra.mxu0 %v1380
    %2097 = vmatpush.bf16.msra.mxu0 %v1374
    %2098 = vmatpush.bf16.msra.mxu0 %v1368
    %2099 = vmatpush.bf16.msra.mxu0 %v1362
    %2100 = vmatpush.bf16.msra.mxu0 %v1356
    %2101 = vmatmul.bf16.gmra.mxu0 %v87
    %v2102 = vpop.f32.mrf.mxu0
    %v2103 = vadd.f32 %v2090, %v2102
    %v2104 = vpop.f32.mrf.mxu0
    %2105 = vdwg.mxu0
    %2106 = vmatpush.bf16.msra.mxu0 %v1446
    %2107 = vmatpush.bf16.msra.mxu0 %v1440
    %2108 = vmatpush.bf16.msra.mxu0 %v1434
    %2109 = vmatpush.bf16.msra.mxu0 %v1428
    %2110 = vmatpush.bf16.msra.mxu0 %v1422
    %2111 = vmatpush.bf16.msra.mxu0 %v1416
    %2112 = vmatpush.bf16.msra.mxu0 %v1410
    %2113 = vmatpush.bf16.msra.mxu0 %v1404
    %2114 = vmatmul.bf16.gmra.mxu0 %v88
    %v2115 = vpop.f32.mrf.mxu0
    %v2116 = vadd.f32 %v2103, %v2115
    %v2117 = vpop.f32.mrf.mxu0
    %2118 = vdwg.mxu0
    %2119 = vmatpush.bf16.msra.mxu0 %v1494
    %2120 = vmatpush.bf16.msra.mxu0 %v1488
    %2121 = vmatpush.bf16.msra.mxu0 %v1482
    %2122 = vmatpush.bf16.msra.mxu0 %v1476
    %2123 = vmatpush.bf16.msra.mxu0 %v1470
    %2124 = vmatpush.bf16.msra.mxu0 %v1464
    %2125 = vmatpush.bf16.msra.mxu0 %v1458
    %2126 = vmatpush.bf16.msra.mxu0 %v1452
    %2127 = vmatmul.bf16.gmra.mxu0 %v89
    %v2128 = vpop.f32.mrf.mxu0
    %v2129 = vadd.f32 %v2116, %v2128
    %v2130 = vpop.f32.mrf.mxu0
    %2131 = vdwg.mxu0
    %2132 = vmatpush.bf16.msra.mxu0 %v1542
    %2133 = vmatpush.bf16.msra.mxu0 %v1536
    %2134 = vmatpush.bf16.msra.mxu0 %v1530
    %2135 = vmatpush.bf16.msra.mxu0 %v1524
    %2136 = vmatpush.bf16.msra.mxu0 %v1518
    %2137 = vmatpush.bf16.msra.mxu0 %v1512
    %2138 = vmatpush.bf16.msra.mxu0 %v1506
    %2139 = vmatpush.bf16.msra.mxu0 %v1500
    %2140 = vmatmul.bf16.gmra.mxu0 %v90
    %v2141 = vpop.f32.mrf.mxu0
    %v2142 = vadd.f32 %v2129, %v2141
    %v2143 = vpop.f32.mrf.mxu0
    %2144 = vdwg.mxu0
    %2145 = vmatpush.bf16.msra.mxu0 %v1303
    %2146 = vmatpush.bf16.msra.mxu0 %v1297
    %2147 = vmatpush.bf16.msra.mxu0 %v1291
    %2148 = vmatpush.bf16.msra.mxu0 %v1285
    %2149 = vmatpush.bf16.msra.mxu0 %v1279
    %2150 = vmatpush.bf16.msra.mxu0 %v1273
    %2151 = vmatpush.bf16.msra.mxu0 %v1267
    %2152 = vmatpush.bf16.msra.mxu0 %v1261
    %2153 = vmatmul.bf16.gmra.mxu0 %v85
    %v2154 = vpop.f32.mrf.mxu0
    %v2155 = vadd.f32 %v385, %v2154
    %v2156 = vpop.f32.mrf.mxu0
    %2157 = vdwg.mxu0
    %2158 = vmatpush.bf16.msra.mxu0 %v1351
    %2159 = vmatpush.bf16.msra.mxu0 %v1345
    %2160 = vmatpush.bf16.msra.mxu0 %v1339
    %2161 = vmatpush.bf16.msra.mxu0 %v1333
    %2162 = vmatpush.bf16.msra.mxu0 %v1327
    %2163 = vmatpush.bf16.msra.mxu0 %v1321
    %2164 = vmatpush.bf16.msra.mxu0 %v1315
    %2165 = vmatpush.bf16.msra.mxu0 %v1309
    %2166 = vmatmul.bf16.gmra.mxu0 %v86
    %v2167 = vpop.f32.mrf.mxu0
    %v2168 = vadd.f32 %v2155, %v2167
    %v2169 = vpop.f32.mrf.mxu0
    %2170 = vdwg.mxu0
    %2171 = vmatpush.bf16.msra.mxu0 %v1399
    %2172 = vmatpush.bf16.msra.mxu0 %v1393
    %2173 = vmatpush.bf16.msra.mxu0 %v1387
    %2174 = vmatpush.bf16.msra.mxu0 %v1381
    %2175 = vmatpush.bf16.msra.mxu0 %v1375
    %2176 = vmatpush.bf16.msra.mxu0 %v1369
    %2177 = vmatpush.bf16.msra.mxu0 %v1363
    %2178 = vmatpush.bf16.msra.mxu0 %v1357
    %2179 = vmatmul.bf16.gmra.mxu0 %v87
    %v2180 = vpop.f32.mrf.mxu0
    %v2181 = vadd.f32 %v2168, %v2180
    %v2182 = vpop.f32.mrf.mxu0
    %2183 = vdwg.mxu0
    %2184 = vmatpush.bf16.msra.mxu0 %v1447
    %2185 = vmatpush.bf16.msra.mxu0 %v1441
    %2186 = vmatpush.bf16.msra.mxu0 %v1435
    %2187 = vmatpush.bf16.msra.mxu0 %v1429
    %2188 = vmatpush.bf16.msra.mxu0 %v1423
    %2189 = vmatpush.bf16.msra.mxu0 %v1417
    %2190 = vmatpush.bf16.msra.mxu0 %v1411
    %2191 = vmatpush.bf16.msra.mxu0 %v1405
    %2192 = vmatmul.bf16.gmra.mxu0 %v88
    %v2193 = vpop.f32.mrf.mxu0
    %v2194 = vadd.f32 %v2181, %v2193
    %v2195 = vpop.f32.mrf.mxu0
    %2196 = vdwg.mxu0
    %2197 = vmatpush.bf16.msra.mxu0 %v1495
    %2198 = vmatpush.bf16.msra.mxu0 %v1489
    %2199 = vmatpush.bf16.msra.mxu0 %v1483
    %2200 = vmatpush.bf16.msra.mxu0 %v1477
    %2201 = vmatpush.bf16.msra.mxu0 %v1471
    %2202 = vmatpush.bf16.msra.mxu0 %v1465
    %2203 = vmatpush.bf16.msra.mxu0 %v1459
    %2204 = vmatpush.bf16.msra.mxu0 %v1453
    %2205 = vmatmul.bf16.gmra.mxu0 %v89
    %v2206 = vpop.f32.mrf.mxu0
    %v2207 = vadd.f32 %v2194, %v2206
    %v2208 = vpop.f32.mrf.mxu0
    %2209 = vdwg.mxu0
    %2210 = vmatpush.bf16.msra.mxu0 %v1543
    %2211 = vmatpush.bf16.msra.mxu0 %v1537
    %2212 = vmatpush.bf16.msra.mxu0 %v1531
    %2213 = vmatpush.bf16.msra.mxu0 %v1525
    %2214 = vmatpush.bf16.msra.mxu0 %v1519
    %2215 = vmatpush.bf16.msra.mxu0 %v1513
    %2216 = vmatpush.bf16.msra.mxu0 %v1507
    %2217 = vmatpush.bf16.msra.mxu0 %v1501
    %2218 = vmatmul.bf16.gmra.mxu0 %v90
    %v2219 = vpop.f32.mrf.mxu0
    %v2220 = vadd.f32 %v2207, %v2219
    %v2221 = vpop.f32.mrf.mxu0
    %2222 = vdwg.mxu0
    %2223 = vmatpush.bf16.msra.mxu0 %v1304
    %2224 = vmatpush.bf16.msra.mxu0 %v1298
    %2225 = vmatpush.bf16.msra.mxu0 %v1292
    %2226 = vmatpush.bf16.msra.mxu0 %v1286
    %2227 = vmatpush.bf16.msra.mxu0 %v1280
    %2228 = vmatpush.bf16.msra.mxu0 %v1274
    %2229 = vmatpush.bf16.msra.mxu0 %v1268
    %2230 = vmatpush.bf16.msra.mxu0 %v1262
    %2231 = vmatmul.bf16.gmra.mxu0 %v85
    %v2232 = vpop.f32.mrf.mxu0
    %v2233 = vadd.f32 %v386, %v2232
    %v2234 = vpop.f32.mrf.mxu0
    %2235 = vdwg.mxu0
    %2236 = vmatpush.bf16.msra.mxu0 %v1352
    %2237 = vmatpush.bf16.msra.mxu0 %v1346
    %2238 = vmatpush.bf16.msra.mxu0 %v1340
    %2239 = vmatpush.bf16.msra.mxu0 %v1334
    %2240 = vmatpush.bf16.msra.mxu0 %v1328
    %2241 = vmatpush.bf16.msra.mxu0 %v1322
    %2242 = vmatpush.bf16.msra.mxu0 %v1316
    %2243 = vmatpush.bf16.msra.mxu0 %v1310
    %2244 = vmatmul.bf16.gmra.mxu0 %v86
    %v2245 = vpop.f32.mrf.mxu0
    %v2246 = vadd.f32 %v2233, %v2245
    %v2247 = vpop.f32.mrf.mxu0
    %2248 = vdwg.mxu0
    %2249 = vmatpush.bf16.msra.mxu0 %v1400
    %2250 = vmatpush.bf16.msra.mxu0 %v1394
    %2251 = vmatpush.bf16.msra.mxu0 %v1388
    %2252 = vmatpush.bf16.msra.mxu0 %v1382
    %2253 = vmatpush.bf16.msra.mxu0 %v1376
    %2254 = vmatpush.bf16.msra.mxu0 %v1370
    %2255 = vmatpush.bf16.msra.mxu0 %v1364
    %2256 = vmatpush.bf16.msra.mxu0 %v1358
    %2257 = vmatmul.bf16.gmra.mxu0 %v87
    %v2258 = vpop.f32.mrf.mxu0
    %v2259 = vadd.f32 %v2246, %v2258
    %v2260 = vpop.f32.mrf.mxu0
    %2261 = vdwg.mxu0
    %2262 = vmatpush.bf16.msra.mxu0 %v1448
    %2263 = vmatpush.bf16.msra.mxu0 %v1442
    %2264 = vmatpush.bf16.msra.mxu0 %v1436
    %2265 = vmatpush.bf16.msra.mxu0 %v1430
    %2266 = vmatpush.bf16.msra.mxu0 %v1424
    %2267 = vmatpush.bf16.msra.mxu0 %v1418
    %2268 = vmatpush.bf16.msra.mxu0 %v1412
    %2269 = vmatpush.bf16.msra.mxu0 %v1406
    %2270 = vmatmul.bf16.gmra.mxu0 %v88
    %v2271 = vpop.f32.mrf.mxu0
    %v2272 = vadd.f32 %v2259, %v2271
    %v2273 = vpop.f32.mrf.mxu0
    %2274 = vdwg.mxu0
    %2275 = vmatpush.bf16.msra.mxu0 %v1496
    %2276 = vmatpush.bf16.msra.mxu0 %v1490
    %2277 = vmatpush.bf16.msra.mxu0 %v1484
    %2278 = vmatpush.bf16.msra.mxu0 %v1478
    %2279 = vmatpush.bf16.msra.mxu0 %v1472
    %2280 = vmatpush.bf16.msra.mxu0 %v1466
    %2281 = vmatpush.bf16.msra.mxu0 %v1460
    %2282 = vmatpush.bf16.msra.mxu0 %v1454
    %2283 = vmatmul.bf16.gmra.mxu0 %v89
    %v2284 = vpop.f32.mrf.mxu0
    %v2285 = vadd.f32 %v2272, %v2284
    %v2286 = vpop.f32.mrf.mxu0
    %2287 = vdwg.mxu0
    %2288 = vmatpush.bf16.msra.mxu0 %v1544
    %2289 = vmatpush.bf16.msra.mxu0 %v1538
    %2290 = vmatpush.bf16.msra.mxu0 %v1532
    %2291 = vmatpush.bf16.msra.mxu0 %v1526
    %2292 = vmatpush.bf16.msra.mxu0 %v1520
    %2293 = vmatpush.bf16.msra.mxu0 %v1514
    %2294 = vmatpush.bf16.msra.mxu0 %v1508
    %2295 = vmatpush.bf16.msra.mxu0 %v1502
    %2296 = vmatmul.bf16.gmra.mxu0 %v90
    %v2297 = vpop.f32.mrf.mxu0
    %v2298 = vadd.f32 %v2285, %v2297
    %v2299 = vpop.f32.mrf.mxu0
    %2300 = vdwg.mxu0
    %v2301 = vtanh.pop %v1908
    %v2302 = vtanh.pop %v1986
    %v2303 = vtanh.pop %v2064
    %v2304 = vtanh.pop %v2142
    %v2305 = vtanh.pop %v2220
    %v2306 = vtanh.pop %v2298
    %v2307 = vld [vmem:[#allocation6] sm:$0xff]
    %v2308 = vld [vmem:[#allocation6 + $0x8] sm:$0xff]
    %v2309 = vld [vmem:[#allocation6 + $0x10] sm:$0xff]
    %v2310 = vld [vmem:[#allocation6 + $0x18] sm:$0xff]
    %v2311 = vld [vmem:[#allocation6 + $0x20] sm:$0xff]
    %v2312 = vld [vmem:[#allocation6 + $0x28] sm:$0xff]
    %v2313 = vld [vmem:[#allocation6 + $0x30] sm:$0xff]
    %v2314 = vld [vmem:[#allocation6 + $0x38] sm:$0xff]
    %v2315 = vld [vmem:[#allocation6 + $0x40] sm:$0xff]
    %v2316 = vld [vmem:[#allocation6 + $0x48] sm:$0xff]
    %v2317 = vld [vmem:[#allocation6 + $0x50] sm:$0xff]
    %v2318 = vld [vmem:[#allocation6 + $0x58] sm:$0xff]
    %v2319 = vld [vmem:[#allocation6 + $0x60] sm:$0xff]
    %v2320 = vld [vmem:[#allocation6 + $0x68] sm:$0xff]
    %v2321 = vld [vmem:[#allocation6 + $0x70] sm:$0xff]
    %v2322 = vld [vmem:[#allocation6 + $0x78] sm:$0xff]
    %v2323 = vld [vmem:[#allocation6 + $0x80] sm:$0xff]
    %v2324 = vld [vmem:[#allocation6 + $0x88] sm:$0xff]
    %v2325 = vld [vmem:[#allocation6 + $0x90] sm:$0xff]
    %v2326 = vld [vmem:[#allocation6 + $0x98] sm:$0xff]
    %v2327 = vld [vmem:[#allocation6 + $0xa0] sm:$0xff]
    %v2328 = vld [vmem:[#allocation6 + $0xa8] sm:$0xff]
    %v2329 = vld [vmem:[#allocation6 + $0xb0] sm:$0xff]
    %v2330 = vld [vmem:[#allocation6 + $0xb8] sm:$0xff]
    %v2331 = vld [vmem:[#allocation6 + $0xc0] sm:$0xff]
    %v2332 = vld [vmem:[#allocation6 + $0xc8] sm:$0xff]
    %v2333 = vld [vmem:[#allocation6 + $0xd0] sm:$0xff]
    %v2334 = vld [vmem:[#allocation6 + $0xd8] sm:$0xff]
    %v2335 = vld [vmem:[#allocation6 + $0xe0] sm:$0xff]
    %v2336 = vld [vmem:[#allocation6 + $0xe8] sm:$0xff]
    %v2337 = vld [vmem:[#allocation6 + $0xf0] sm:$0xff]
    %v2338 = vld [vmem:[#allocation6 + $0xf8] sm:$0xff]
    %v2339 = vld [vmem:[#allocation6 + $0x100] sm:$0xff]
    %v2340 = vld [vmem:[#allocation6 + $0x108] sm:$0xff]
    %v2341 = vld [vmem:[#allocation6 + $0x110] sm:$0xff]
    %v2342 = vld [vmem:[#allocation6 + $0x118] sm:$0xff]
    %v2343 = vld [vmem:[#allocation6 + $0x120] sm:$0xff]
    %v2344 = vld [vmem:[#allocation6 + $0x128] sm:$0xff]
    %v2345 = vld [vmem:[#allocation6 + $0x130] sm:$0xff]
    %v2346 = vld [vmem:[#allocation6 + $0x138] sm:$0xff]
    %v2347 = vld [vmem:[#allocation6 + $0x140] sm:$0xff]
    %v2348 = vld [vmem:[#allocation6 + $0x148] sm:$0xff]
    %v2349 = vld [vmem:[#allocation6 + $0x150] sm:$0xff]
    %v2350 = vld [vmem:[#allocation6 + $0x158] sm:$0xff]
    %v2351 = vld [vmem:[#allocation6 + $0x160] sm:$0xff]
    %v2352 = vld [vmem:[#allocation6 + $0x168] sm:$0xff]
    %v2353 = vld [vmem:[#allocation6 + $0x170] sm:$0xff]
    %v2354 = vld [vmem:[#allocation6 + $0x178] sm:$0xff]
    %v2355 = vld [vmem:[#allocation6 + $0x180] sm:$0xff]
    %v2356 = vld [vmem:[#allocation6 + $0x188] sm:$0xff]
    %v2357 = vld [vmem:[#allocation6 + $0x190] sm:$0xff]
    %v2358 = vld [vmem:[#allocation6 + $0x198] sm:$0xff]
    %v2359 = vld [vmem:[#allocation6 + $0x1a0] sm:$0xff]
    %v2360 = vld [vmem:[#allocation6 + $0x1a8] sm:$0xff]
    %v2361 = vld [vmem:[#allocation6 + $0x1b0] sm:$0xff]
    %v2362 = vld [vmem:[#allocation6 + $0x1b8] sm:$0xff]
    %v2363 = vld [vmem:[#allocation6 + $0x1c0] sm:$0xff]
    %v2364 = vld [vmem:[#allocation6 + $0x1c8] sm:$0xff]
    %v2365 = vld [vmem:[#allocation6 + $0x1d0] sm:$0xff]
    %v2366 = vld [vmem:[#allocation6 + $0x1d8] sm:$0xff]
    %v2367 = vld [vmem:[#allocation6 + $0x1e0] sm:$0xff]
    %v2368 = vld [vmem:[#allocation6 + $0x1e8] sm:$0xff]
    %v2369 = vld [vmem:[#allocation6 + $0x1f0] sm:$0xff]
    %v2370 = vld [vmem:[#allocation6 + $0x1f8] sm:$0xff]
    %v2371 = vld [vmem:[#allocation6 + $0x200] sm:$0xff]
    %v2372 = vld [vmem:[#allocation6 + $0x208] sm:$0xff]
    %v2373 = vld [vmem:[#allocation6 + $0x210] sm:$0xff]
    %v2374 = vld [vmem:[#allocation6 + $0x218] sm:$0xff]
    %v2375 = vld [vmem:[#allocation6 + $0x220] sm:$0xff]
    %v2376 = vld [vmem:[#allocation6 + $0x228] sm:$0xff]
    %v2377 = vld [vmem:[#allocation6 + $0x230] sm:$0xff]
    %v2378 = vld [vmem:[#allocation6 + $0x238] sm:$0xff]
    %v2379 = vld [vmem:[#allocation6 + $0x240] sm:$0xff]
    %v2380 = vld [vmem:[#allocation6 + $0x248] sm:$0xff]
    %v2381 = vld [vmem:[#allocation6 + $0x250] sm:$0xff]
    %v2382 = vld [vmem:[#allocation6 + $0x258] sm:$0xff]
    %v2383 = vld [vmem:[#allocation6 + $0x260] sm:$0xff]
    %v2384 = vld [vmem:[#allocation6 + $0x268] sm:$0xff]
    %v2385 = vld [vmem:[#allocation6 + $0x270] sm:$0xff]
    %v2386 = vld [vmem:[#allocation6 + $0x278] sm:$0xff]
    %v2387 = vld [vmem:[#allocation6 + $0x280] sm:$0xff]
    %v2388 = vld [vmem:[#allocation6 + $0x288] sm:$0xff]
    %v2389 = vld [vmem:[#allocation6 + $0x290] sm:$0xff]
    %v2390 = vld [vmem:[#allocation6 + $0x298] sm:$0xff]
    %v2391 = vld [vmem:[#allocation6 + $0x2a0] sm:$0xff]
    %v2392 = vld [vmem:[#allocation6 + $0x2a8] sm:$0xff]
    %v2393 = vld [vmem:[#allocation6 + $0x2b0] sm:$0xff]
    %v2394 = vld [vmem:[#allocation6 + $0x2b8] sm:$0xff]
    %v2395 = vld [vmem:[#allocation6 + $0x2c0] sm:$0xff]
    %v2396 = vld [vmem:[#allocation6 + $0x2c8] sm:$0xff]
    %v2397 = vld [vmem:[#allocation6 + $0x2d0] sm:$0xff]
    %v2398 = vld [vmem:[#allocation6 + $0x2d8] sm:$0xff]
    %v2399 = vld [vmem:[#allocation6 + $0x2e0] sm:$0xff]
    %v2400 = vld [vmem:[#allocation6 + $0x2e8] sm:$0xff]
    %v2401 = vld [vmem:[#allocation6 + $0x2f0] sm:$0xff]
    %v2402 = vld [vmem:[#allocation6 + $0x2f8] sm:$0xff]
    %v2403 = vld [vmem:[#allocation7] sm:$0x1]
    %v2405 = vperm.slane %v2403, 0
    %2407 = vmatpush.msra.mxu0 %v2322
    %2408 = vmatpush.msra.mxu0 %v2321
    %2409 = vmatpush.msra.mxu0 %v2320
    %2410 = vmatpush.msra.mxu0 %v2319
    %2411 = vmatpush.msra.mxu0 %v2318
    %2412 = vmatpush.msra.mxu0 %v2317
    %2413 = vmatpush.msra.mxu0 %v2316
    %2414 = vmatpush.msra.mxu0 %v2315
    %2415 = vmatpush.msra.mxu0 %v2314
    %2416 = vmatpush.msra.mxu0 %v2313
    %2417 = vmatpush.msra.mxu0 %v2312
    %2418 = vmatpush.msra.mxu0 %v2311
    %2419 = vmatpush.msra.mxu0 %v2310
    %2420 = vmatpush.msra.mxu0 %v2309
    %2421 = vmatpush.msra.mxu0 %v2308
    %2422 = vmatpush.msra.mxu0 %v2307
    %2423 = vmatmul.f32.gmra.mxu0 %v2301
    %v2424 = vpop.f32.mrf.mxu0
    %v2425 = vadd.f32 %v2405, %v2424
    %2426 = vdwg.mxu0
    %2427 = vmatpush.msra.mxu0 %v2338
    %2428 = vmatpush.msra.mxu0 %v2337
    %2429 = vmatpush.msra.mxu0 %v2336
    %2430 = vmatpush.msra.mxu0 %v2335
    %2431 = vmatpush.msra.mxu0 %v2334
    %2432 = vmatpush.msra.mxu0 %v2333
    %2433 = vmatpush.msra.mxu0 %v2332
    %2434 = vmatpush.msra.mxu0 %v2331
    %2435 = vmatpush.msra.mxu0 %v2330
    %2436 = vmatpush.msra.mxu0 %v2329
    %2437 = vmatpush.msra.mxu0 %v2328
    %2438 = vmatpush.msra.mxu0 %v2327
    %2439 = vmatpush.msra.mxu0 %v2326
    %2440 = vmatpush.msra.mxu0 %v2325
    %2441 = vmatpush.msra.mxu0 %v2324
    %2442 = vmatpush.msra.mxu0 %v2323
    %2443 = vmatmul.f32.gmra.mxu0 %v2302
    %v2444 = vpop.f32.mrf.mxu0
    %v2445 = vadd.f32 %v2425, %v2444
    %2446 = vdwg.mxu0
    %2447 = vmatpush.msra.mxu0 %v2354
    %2448 = vmatpush.msra.mxu0 %v2353
    %2449 = vmatpush.msra.mxu0 %v2352
    %2450 = vmatpush.msra.mxu0 %v2351
    %2451 = vmatpush.msra.mxu0 %v2350
    %2452 = vmatpush.msra.mxu0 %v2349
    %2453 = vmatpush.msra.mxu0 %v2348
    %2454 = vmatpush.msra.mxu0 %v2347
    %2455 = vmatpush.msra.mxu0 %v2346
    %2456 = vmatpush.msra.mxu0 %v2345
    %2457 = vmatpush.msra.mxu0 %v2344
    %2458 = vmatpush.msra.mxu0 %v2343
    %2459 = vmatpush.msra.mxu0 %v2342
    %2460 = vmatpush.msra.mxu0 %v2341
    %2461 = vmatpush.msra.mxu0 %v2340
    %2462 = vmatpush.msra.mxu0 %v2339
    %2463 = vmatmul.f32.gmra.mxu0 %v2303
    %v2464 = vpop.f32.mrf.mxu0
    %v2465 = vadd.f32 %v2445, %v2464
    %2466 = vdwg.mxu0
    %2467 = vmatpush.msra.mxu0 %v2370
    %2468 = vmatpush.msra.mxu0 %v2369
    %2469 = vmatpush.msra.mxu0 %v2368
    %2470 = vmatpush.msra.mxu0 %v2367
    %2471 = vmatpush.msra.mxu0 %v2366
    %2472 = vmatpush.msra.mxu0 %v2365
    %2473 = vmatpush.msra.mxu0 %v2364
    %2474 = vmatpush.msra.mxu0 %v2363
    %2475 = vmatpush.msra.mxu0 %v2362
    %2476 = vmatpush.msra.mxu0 %v2361
    %2477 = vmatpush.msra.mxu0 %v2360
    %2478 = vmatpush.msra.mxu0 %v2359
    %2479 = vmatpush.msra.mxu0 %v2358
    %2480 = vmatpush.msra.mxu0 %v2357
    %2481 = vmatpush.msra.mxu0 %v2356
    %2482 = vmatpush.msra.mxu0 %v2355
    %2483 = vmatmul.f32.gmra.mxu0 %v2304
    %v2484 = vpop.f32.mrf.mxu0
    %v2485 = vadd.f32 %v2465, %v2484
    %2486 = vdwg.mxu0
    %2487 = vmatpush.msra.mxu0 %v2386
    %2488 = vmatpush.msra.mxu0 %v2385
    %2489 = vmatpush.msra.mxu0 %v2384
    %2490 = vmatpush.msra.mxu0 %v2383
    %2491 = vmatpush.msra.mxu0 %v2382
    %2492 = vmatpush.msra.mxu0 %v2381
    %2493 = vmatpush.msra.mxu0 %v2380
    %2494 = vmatpush.msra.mxu0 %v2379
    %2495 = vmatpush.msra.mxu0 %v2378
    %2496 = vmatpush.msra.mxu0 %v2377
    %2497 = vmatpush.msra.mxu0 %v2376
    %2498 = vmatpush.msra.mxu0 %v2375
    %2499 = vmatpush.msra.mxu0 %v2374
    %2500 = vmatpush.msra.mxu0 %v2373
    %2501 = vmatpush.msra.mxu0 %v2372
    %2502 = vmatpush.msra.mxu0 %v2371
    %2503 = vmatmul.f32.gmra.mxu0 %v2305
    %v2504 = vpop.f32.mrf.mxu0
    %v2505 = vadd.f32 %v2485, %v2504
    %2506 = vdwg.mxu0
    %2507 = vmatpush.msra.mxu0 %v2402
    %2508 = vmatpush.msra.mxu0 %v2401
    %2509 = vmatpush.msra.mxu0 %v2400
    %2510 = vmatpush.msra.mxu0 %v2399
    %2511 = vmatpush.msra.mxu0 %v2398
    %2512 = vmatpush.msra.mxu0 %v2397
    %2513 = vmatpush.msra.mxu0 %v2396
    %2514 = vmatpush.msra.mxu0 %v2395
    %2515 = vmatpush.msra.mxu0 %v2394
    %2516 = vmatpush.msra.mxu0 %v2393
    %2517 = vmatpush.msra.mxu0 %v2392
    %2518 = vmatpush.msra.mxu0 %v2391
    %2519 = vmatpush.msra.mxu0 %v2390
    %2520 = vmatpush.msra.mxu0 %v2389
    %2521 = vmatpush.msra.mxu0 %v2388
    %2522 = vmatpush.msra.mxu0 %v2387
    %2523 = vmatmul.f32.gmra.mxu0 %v2306
    %v2524 = vpop.f32.mrf.mxu0
    %v2525 = vadd.f32 %v2505, %v2524
    %2526 = vdwg.mxu0
    %2527 = vst [vmem:[%s5] sm:$0xff] %v2525
    // Predicated region
    $region38: #{bert_cls_forward.1} parent=1 // pred_check
      _
    $region39: #{bert_cls_forward.1} parent=1 // pred_check_branch
      %2529 = sbr.rel (0) target = $region41
    $region40: #{bert_cls_forward.1} parent=1 // pred_region
      _
    $region41: #{bert_cls_forward.1} parent=1 // pred_fallthru
      _
    // Predicated region
    $region42: #{bert_cls_forward.1} parent=1 // pred_check
      _
    $region43: #{bert_cls_forward.1} parent=1 // pred_check_branch
      %2531 = sbr.rel (0) target = $region45
    $region44: #{bert_cls_forward.1} parent=1 // pred_region
      _
    $region45: #{bert_cls_forward.1} parent=1 // pred_fallthru
      _
    %2532 = vsyncpa [#allocation3], 1
    %2533 = vsyncpa [#allocation5], 1
    %2534 = vsyncpa [#allocation8], 1

</llo_original>
